<compile_context>
chip_gen: v6e
topology: v6e:2x2x1
jax: 0.10.0
libtpu: 0.0.40
codegen_flags: <defaults>
</compile_context>

<pallas_src>
import functools

import jax
import jax.numpy as jnp
from jax import lax
from jax.experimental import pallas as pl
from jax.experimental.pallas import tpu as pltpu


def _decoder_kernel(W, x_ref, mask_ref, w1_ref, b1_ref,
                    wdh_ref, wdx_ref, wdy_ref, wdxy_ref, b2_ref,
                    w3_ref, b3_ref, o_ref):
    C4 = w1_ref.shape[0]
    Cout = w3_ref.shape[0]
    P = x_ref.shape[-1]                                   # pixels of this image on the lane axis

    # ---- conv1 (1x1) + BN1 + ReLU (BN folded): (C4, Cin) @ (Cin, P) ----
    h = jnp.dot(w1_ref[...], x_ref[...], preferred_element_type=jnp.float32)
    h = jnp.maximum(h + b1_ref[...], 0.0)                 # (C4, P)

    # host-precomputed image-boundary masks, pre-tiled to C4 sublanes
    mx = mask_ref[0:C4, :]                                # col < W-1
    my = mask_ref[C4:2 * C4, :]                           # row < H-1

    # ---- neighbour taps for the stride-2 transposed conv (lane-axis XLU rotates) ----
    hx = pltpu.roll(h, P - 1, axis=1) * mx                # h[:, p+1]
    hy = pltpu.roll(h, P - W, axis=1) * my                # h[:, p+W]
    hxy = pltpu.roll(hy, P - 1, axis=1) * mx              # h[:, p+W+1] (both masks applied)

    # ---- deconv: accumulated partial dots; zero tap-blocks are skipped entirely ----
    d_h = jnp.dot(wdh_ref[...], h, preferred_element_type=jnp.float32)      # (4*C4, P) [ee,eo,oe,oo]
    d_x = jnp.dot(wdx_ref[...], hx, preferred_element_type=jnp.float32)     # (2*C4, P) [eo,oo]
    d_y = jnp.dot(wdy_ref[...], hy, preferred_element_type=jnp.float32)     # (2*C4, P) [oe,oo]
    d_xy = jnp.dot(wdxy_ref[...], hxy, preferred_element_type=jnp.float32)  # (C4, P)   [oo]

    d_ee = d_h[0 * C4:1 * C4]
    d_eo = d_h[1 * C4:2 * C4] + d_x[0:C4]
    d_oe = d_h[2 * C4:3 * C4] + d_y[0:C4]
    d_oo = d_h[3 * C4:4 * C4] + d_x[C4:2 * C4] + d_y[C4:2 * C4] + d_xy

    b2 = b2_ref[...]
    w3 = w3_ref[...]
    b3 = b3_ref[...]
    # ---- BN2 + ReLU, conv3 (1x1) + BN3 + ReLU per parity plane; sublane-aligned dense stores ----
    for k, dk in enumerate((d_ee, d_eo, d_oe, d_oo)):
        dk = jnp.maximum(dk + b2, 0.0)                                        # (C4, P)
        yk = jnp.dot(w3, dk, preferred_element_type=jnp.float32)              # (Cout, P)
        o_ref[k * Cout:(k + 1) * Cout, :] = jnp.maximum(yk + b3, 0.0)


def decoder_block_pallas(x_nchw, params, eps=1e-5):
    N, Cin, H, W = x_nchw.shape
    P = H * W

    def fold(gamma, beta, mean, var):
        s = gamma / jnp.sqrt(var + eps)
        return s, beta - mean * s

    # conv1 (1x1) + BN1 folded; output-major (C4, Cin) for W @ x
    s1, t1 = fold(*params["bn1"])
    w1 = (params["w1"][:, :, 0, 0] * s1[:, None]).astype(jnp.float32)        # (C4, Cin)
    b1 = ((params["b1"] * s1 + t1)[:, None]).astype(jnp.float32)             # (C4, 1)
    C4 = w1.shape[0]

    # deconv (k3, s2, p1, op1) + BN2 folded. torch weight layout: (Cin_d, Cout_d, 3, 3).
    s2, t2 = fold(*params["bn2"])

    def tap(ky, kx):                                                         # (Cout_d, Cin_d)
        return params["wd"][:, :, ky, kx].T * s2[:, None]

    # row groups = destination parity planes [ee, eo, oe, oo]
    wdh = jnp.concatenate([tap(1, 1), tap(1, 2), tap(2, 1), tap(2, 2)], axis=0).astype(jnp.float32)
    wdx = jnp.concatenate([tap(1, 0), tap(2, 0)], axis=0).astype(jnp.float32)   # -> [eo, oo]
    wdy = jnp.concatenate([tap(0, 1), tap(0, 2)], axis=0).astype(jnp.float32)   # -> [oe, oo]
    wdxy = tap(0, 0).astype(jnp.float32)                                        # -> [oo]
    b2 = ((params["bd"] * s2 + t2)[:, None]).astype(jnp.float32)             # (C4, 1)

    # conv3 (1x1) + BN3 folded
    s3, t3 = fold(*params["bn3"])
    w3 = (params["w3"][:, :, 0, 0] * s3[:, None]).astype(jnp.float32)        # (Cout, C4)
    b3 = ((params["b3"] * s3 + t3)[:, None]).astype(jnp.float32)             # (Cout, 1)
    Cout = w3.shape[0]

    # host-precomputed boundary masks for the rolled taps (no in-kernel div/mod), tiled to C4 rows
    p = jnp.arange(P, dtype=jnp.int32)
    mx = (p % W < W - 1).astype(jnp.float32)
    my = (p // W < H - 1).astype(jnp.float32)
    mask = jnp.concatenate([jnp.tile(mx[None, :], (C4, 1)),
                            jnp.tile(my[None, :], (C4, 1))], axis=0)         # (2*C4, P)

    # NCHW -> (N, Cin, H*W): contiguous reshape, no HBM transpose.
    x3 = x_nchw.reshape(N, Cin, P).astype(jnp.float32)

    def rep(shape):
        nd = len(shape)
        return pl.BlockSpec(shape, lambda n, nd=nd: (0,) * nd)

    out = pl.pallas_call(
        functools.partial(_decoder_kernel, W),
        out_shape=jax.ShapeDtypeStruct((N, 4 * Cout, P), jnp.float32),
        grid=(N,),
        in_specs=[
            pl.BlockSpec((None, Cin, P), lambda n: (n, 0, 0)),   # one image per grid step
            rep((2 * C4, P)),                                    # masks (resident)
            rep((C4, Cin)), rep((C4, 1)),                        # conv1 + BN1 (folded)
            rep((4 * C4, C4)), rep((2 * C4, C4)),                # deconv tap weights
            rep((2 * C4, C4)), rep((C4, C4)), rep((C4, 1)),
            rep((Cout, C4)), rep((Cout, 1)),                     # conv3 + BN3 (folded)
        ],
        out_specs=pl.BlockSpec((None, 4 * Cout, P), lambda n: (n, 0, 0)),
        compiler_params=pltpu.CompilerParams(dimension_semantics=("parallel",)),
    )(x3, mask, w1, b1, wdh, wdx, wdy, wdxy, b2, w3, b3)

    # Un-interleave the parity planes — the single remaining host-side transpose.
    y = out.reshape(N, 2, 2, Cout, H, W)                  # (n, py, px, c, i, j)
    y = jnp.transpose(y, (0, 3, 4, 1, 5, 2))              # (n, c, i, py, j, px)
    return y.reshape(N, Cout, 2 * H, 2 * W)               # NCHW


def decoder_block_reference(x_nchw, params, eps=1e-5):
    """Pure-JAX reference matching PyTorch (eval-mode BN)."""
    x = jnp.transpose(x_nchw, (0, 2, 3, 1)).astype(jnp.float32)    # NHWC

    def bn(v, stats):
        g, b, m, var = stats
        return (v - m) / jnp.sqrt(var + eps) * g + b

    h = jnp.einsum('nhwc,dc->nhwd', x, params["w1"][:, :, 0, 0]) + params["b1"]
    h = jnp.maximum(bn(h, params["bn1"]), 0.0)

    k = jnp.flip(params["wd"], axis=(2, 3))                        # flip spatially
    k = jnp.transpose(k, (2, 3, 0, 1))                             # HWIO (I = deconv in-channels)
    h = lax.conv_general_dilated(h, k, window_strides=(1, 1),
                                 padding=((1, 2), (1, 2)),
                                 lhs_dilation=(2, 2),
                                 dimension_numbers=('NHWC', 'HWIO', 'NHWC')) + params["bd"]
    h = jnp.maximum(bn(h, params["bn2"]), 0.0)

    h = jnp.einsum('nhwc,dc->nhwd', h, params["w3"][:, :, 0, 0]) + params["b3"]
    h = jnp.maximum(bn(h, params["bn3"]), 0.0)
    return jnp.transpose(h, (0, 3, 1, 2))                          # NCHW


if __name__ == "__main__":
    in_channels, n_filters = 32, 16
    c4 = in_channels // 4
    N, H, W = 2, 16, 16

    key = jax.random.PRNGKey(0)
    ks = list(jax.random.split(key, 20))

    def nrm(k, shape, scale=0.2):
        return jax.random.normal(k, shape, jnp.float32) * scale

    params = {
        "w1": nrm(ks[0], (c4, in_channels, 1, 1)),
        "b1": nrm(ks[1], (c4,)),
        "bn1": (nrm(ks[2], (c4,), 0.1) + 1.0, nrm(ks[3], (c4,), 0.1),
                nrm(ks[4], (c4,), 0.1),
                jax.random.uniform(ks[5], (c4,), jnp.float32, 0.5, 1.5)),
        "wd": nrm(ks[6], (c4, c4, 3, 3)),
        "bd": nrm(ks[7], (c4,)),
        "bn2": (nrm(ks[8], (c4,), 0.1) + 1.0, nrm(ks[9], (c4,), 0.1),
                nrm(ks[10], (c4,), 0.1),
                jax.random.uniform(ks[11], (c4,), jnp.float32, 0.5, 1.5)),
        "w3": nrm(ks[12], (n_filters, c4, 1, 1)),
        "b3": nrm(ks[13], (n_filters,)),
        "bn3": (nrm(ks[14], (n_filters,), 0.1) + 1.0, nrm(ks[15], (n_filters,), 0.1),
                nrm(ks[16], (n_filters,), 0.1),
                jax.random.uniform(ks[17], (n_filters,), jnp.float32, 0.5, 1.5)),
    }
    x = jax.random.normal(ks[18], (N, in_channels, H, W), jnp.float32)

    out = jax.block_until_ready(decoder_block_pallas(x, params))
    ref = jax.block_until_ready(decoder_block_reference(x, params))

    assert out.shape == (N, n_filters, 2 * H, 2 * W), out.shape
    assert jnp.max(jnp.abs(out - ref)) < 1e-4, float(jnp.max(jnp.abs(out - ref)))
    print("KERNEL_OK")
</pallas_src>

<mosaic_0001>
module attributes {stable_mosaic.version = 11 : i64} {
  func.func @_decoder_kernel(%arg0: i32, %arg1: memref<1x32x256xf32, #tpu.memory_space<vmem>>, %arg2: memref<16x256xf32, #tpu.memory_space<vmem>>, %arg3: memref<8x32xf32, #tpu.memory_space<vmem>>, %arg4: memref<8x1xf32, #tpu.memory_space<vmem>>, %arg5: memref<32x8xf32, #tpu.memory_space<vmem>>, %arg6: memref<16x8xf32, #tpu.memory_space<vmem>>, %arg7: memref<16x8xf32, #tpu.memory_space<vmem>>, %arg8: memref<8x8xf32, #tpu.memory_space<vmem>>, %arg9: memref<8x1xf32, #tpu.memory_space<vmem>>, %arg10: memref<16x8xf32, #tpu.memory_space<vmem>>, %arg11: memref<16x1xf32, #tpu.memory_space<vmem>>, %arg12: memref<1x64x256xf32, #tpu.memory_space<vmem>>) attributes {dimension_semantics = [#tpu.dimension_semantics<parallel>], iteration_bounds = array<i64: 2>, scalar_prefetch = 0 : i64, scratch_operands = 0 : i64, tpu.core_type = #tpu.core_type<tc>, window_params = [{transform_indices = @transform_0, window_bounds = array<i64: 1, 32, 256>}, {pipeline_mode = #tpu.pipeline_mode<synchronous>, transform_indices = @transform_1, window_bounds = array<i64: 16, 256>}, {pipeline_mode = #tpu.pipeline_mode<synchronous>, transform_indices = @transform_2, window_bounds = array<i64: 8, 32>}, {pipeline_mode = #tpu.pipeline_mode<synchronous>, transform_indices = @transform_3, window_bounds = array<i64: 8, 1>}, {pipeline_mode = #tpu.pipeline_mode<synchronous>, transform_indices = @transform_4, window_bounds = array<i64: 32, 8>}, {pipeline_mode = #tpu.pipeline_mode<synchronous>, transform_indices = @transform_5, window_bounds = array<i64: 16, 8>}, {pipeline_mode = #tpu.pipeline_mode<synchronous>, transform_indices = @transform_6, window_bounds = array<i64: 16, 8>}, {pipeline_mode = #tpu.pipeline_mode<synchronous>, transform_indices = @transform_7, window_bounds = array<i64: 8, 8>}, {pipeline_mode = #tpu.pipeline_mode<synchronous>, transform_indices = @transform_8, window_bounds = array<i64: 8, 1>}, {pipeline_mode = #tpu.pipeline_mode<synchronous>, transform_indices = @transform_9, window_bounds = array<i64: 16, 8>}, {pipeline_mode = #tpu.pipeline_mode<synchronous>, transform_indices = @transform_10, window_bounds = array<i64: 16, 1>}, {transform_indices = @transform_11, window_bounds = array<i64: 1, 64, 256>}]} {
    %c0 = arith.constant 0 : index
    %c0_0 = arith.constant 0 : index
    %0 = vector.load %arg3[%c0, %c0_0] : memref<8x32xf32, #tpu.memory_space<vmem>>, vector<8x32xf32>
    %c0_1 = arith.constant 0 : index
    %c0_2 = arith.constant 0 : index
    %c0_3 = arith.constant 0 : index
    %1 = vector.load %arg1[%c0_1, %c0_2, %c0_3] : memref<1x32x256xf32, #tpu.memory_space<vmem>>, vector<1x32x256xf32>
    %2 = vector.shape_cast %1 : vector<1x32x256xf32> to vector<32x256xf32>
    %cst = arith.constant dense<0.000000e+00> : vector<8x256xf32>
    %3 = tpu.matmul %0, %2, %cst {dimension_numbers = #tpu.dot_dimension_numbers<[1], [0], [0], [1], [0, 0, 1, 1], [], []>} : vector<8x32xf32>, vector<32x256xf32>, vector<8x256xf32> -> vector<8x256xf32>
    %c0_4 = arith.constant 0 : index
    %c0_5 = arith.constant 0 : index
    %4 = vector.load %arg4[%c0_4, %c0_5] : memref<8x1xf32, #tpu.memory_space<vmem>>, vector<8x1xf32>
    %5 = vector.broadcast %4 : vector<8x1xf32> to vector<8x256xf32>
    %6 = arith.addf %3, %5 : vector<8x256xf32>
    %cst_6 = arith.constant 0.000000e+00 : f32
    %7 = vector.broadcast %cst_6 : f32 to vector<8x256xf32>
    %8 = arith.maximumf %6, %7 : vector<8x256xf32>
    %c0_7 = arith.constant 0 : index
    %c0_8 = arith.constant 0 : index
    %9 = vector.load %arg2[%c0_7, %c0_8] : memref<16x256xf32, #tpu.memory_space<vmem>>, vector<8x256xf32>
    %c8 = arith.constant 8 : index
    %c0_9 = arith.constant 0 : index
    %10 = vector.load %arg2[%c8, %c0_9] : memref<16x256xf32, #tpu.memory_space<vmem>>, vector<8x256xf32>
    %c255_i32 = arith.constant 255 : i32
    %11 = tpu.dynamic_rotate %8 by %c255_i32 dim 1 : vector<8x256xf32>, i32 -> vector<8x256xf32>
    %12 = arith.mulf %11, %9 : vector<8x256xf32>
    %c240_i32 = arith.constant 240 : i32
    %13 = tpu.dynamic_rotate %8 by %c240_i32 dim 1 : vector<8x256xf32>, i32 -> vector<8x256xf32>
    %14 = arith.mulf %13, %10 : vector<8x256xf32>
    %c255_i32_10 = arith.constant 255 : i32
    %15 = tpu.dynamic_rotate %14 by %c255_i32_10 dim 1 : vector<8x256xf32>, i32 -> vector<8x256xf32>
    %16 = arith.mulf %15, %9 : vector<8x256xf32>
    %c0_11 = arith.constant 0 : index
    %c0_12 = arith.constant 0 : index
    %17 = vector.load %arg5[%c0_11, %c0_12] : memref<32x8xf32, #tpu.memory_space<vmem>>, vector<32x8xf32>
    %cst_13 = arith.constant dense<0.000000e+00> : vector<32x256xf32>
    %18 = tpu.matmul %17, %8, %cst_13 {dimension_numbers = #tpu.dot_dimension_numbers<[1], [0], [0], [1], [0, 0, 1, 1], [], []>} : vector<32x8xf32>, vector<8x256xf32>, vector<32x256xf32> -> vector<32x256xf32>
    %c0_14 = arith.constant 0 : index
    %c0_15 = arith.constant 0 : index
    %19 = vector.load %arg6[%c0_14, %c0_15] : memref<16x8xf32, #tpu.memory_space<vmem>>, vector<16x8xf32>
    %cst_16 = arith.constant dense<0.000000e+00> : vector<16x256xf32>
    %20 = tpu.matmul %19, %12, %cst_16 {dimension_numbers = #tpu.dot_dimension_numbers<[1], [0], [0], [1], [0, 0, 1, 1], [], []>} : vector<16x8xf32>, vector<8x256xf32>, vector<16x256xf32> -> vector<16x256xf32>
    %c0_17 = arith.constant 0 : index
    %c0_18 = arith.constant 0 : index
    %21 = vector.load %arg7[%c0_17, %c0_18] : memref<16x8xf32, #tpu.memory_space<vmem>>, vector<16x8xf32>
    %cst_19 = arith.constant dense<0.000000e+00> : vector<16x256xf32>
    %22 = tpu.matmul %21, %14, %cst_19 {dimension_numbers = #tpu.dot_dimension_numbers<[1], [0], [0], [1], [0, 0, 1, 1], [], []>} : vector<16x8xf32>, vector<8x256xf32>, vector<16x256xf32> -> vector<16x256xf32>
    %c0_20 = arith.constant 0 : index
    %c0_21 = arith.constant 0 : index
    %23 = vector.load %arg8[%c0_20, %c0_21] : memref<8x8xf32, #tpu.memory_space<vmem>>, vector<8x8xf32>
    %cst_22 = arith.constant dense<0.000000e+00> : vector<8x256xf32>
    %24 = tpu.matmul %23, %16, %cst_22 {dimension_numbers = #tpu.dot_dimension_numbers<[1], [0], [0], [1], [0, 0, 1, 1], [], []>} : vector<8x8xf32>, vector<8x256xf32>, vector<8x256xf32> -> vector<8x256xf32>
    %25 = vector.extract_strided_slice %18 {offsets = [0, 0], sizes = [8, 256], strides = [1, 1]} : vector<32x256xf32> to vector<8x256xf32>
    %26 = vector.extract_strided_slice %18 {offsets = [8, 0], sizes = [8, 256], strides = [1, 1]} : vector<32x256xf32> to vector<8x256xf32>
    %27 = vector.extract_strided_slice %20 {offsets = [0, 0], sizes = [8, 256], strides = [1, 1]} : vector<16x256xf32> to vector<8x256xf32>
    %28 = arith.addf %26, %27 : vector<8x256xf32>
    %29 = vector.extract_strided_slice %18 {offsets = [16, 0], sizes = [8, 256], strides = [1, 1]} : vector<32x256xf32> to vector<8x256xf32>
    %30 = vector.extract_strided_slice %22 {offsets = [0, 0], sizes = [8, 256], strides = [1, 1]} : vector<16x256xf32> to vector<8x256xf32>
    %31 = arith.addf %29, %30 : vector<8x256xf32>
    %32 = vector.extract_strided_slice %18 {offsets = [24, 0], sizes = [8, 256], strides = [1, 1]} : vector<32x256xf32> to vector<8x256xf32>
    %33 = vector.extract_strided_slice %20 {offsets = [8, 0], sizes = [8, 256], strides = [1, 1]} : vector<16x256xf32> to vector<8x256xf32>
    %34 = arith.addf %32, %33 : vector<8x256xf32>
    %35 = vector.extract_strided_slice %22 {offsets = [8, 0], sizes = [8, 256], strides = [1, 1]} : vector<16x256xf32> to vector<8x256xf32>
    %36 = arith.addf %34, %35 : vector<8x256xf32>
    %37 = arith.addf %36, %24 : vector<8x256xf32>
    %c0_23 = arith.constant 0 : index
    %c0_24 = arith.constant 0 : index
    %38 = vector.load %arg9[%c0_23, %c0_24] : memref<8x1xf32, #tpu.memory_space<vmem>>, vector<8x1xf32>
    %c0_25 = arith.constant 0 : index
    %c0_26 = arith.constant 0 : index
    %39 = vector.load %arg10[%c0_25, %c0_26] : memref<16x8xf32, #tpu.memory_space<vmem>>, vector<16x8xf32>
    %c0_27 = arith.constant 0 : index
    %c0_28 = arith.constant 0 : index
    %40 = vector.load %arg11[%c0_27, %c0_28] : memref<16x1xf32, #tpu.memory_space<vmem>>, vector<16x1xf32>
    %41 = vector.broadcast %38 : vector<8x1xf32> to vector<8x256xf32>
    %42 = arith.addf %25, %41 : vector<8x256xf32>
    %cst_29 = arith.constant 0.000000e+00 : f32
    %43 = vector.broadcast %cst_29 : f32 to vector<8x256xf32>
    %44 = arith.maximumf %42, %43 : vector<8x256xf32>
    %cst_30 = arith.constant dense<0.000000e+00> : vector<16x256xf32>
    %45 = tpu.matmul %39, %44, %cst_30 {dimension_numbers = #tpu.dot_dimension_numbers<[1], [0], [0], [1], [0, 0, 1, 1], [], []>} : vector<16x8xf32>, vector<8x256xf32>, vector<16x256xf32> -> vector<16x256xf32>
    %46 = vector.broadcast %40 : vector<16x1xf32> to vector<16x256xf32>
    %47 = arith.addf %45, %46 : vector<16x256xf32>
    %cst_31 = arith.constant 0.000000e+00 : f32
    %48 = vector.broadcast %cst_31 : f32 to vector<16x256xf32>
    %49 = arith.maximumf %47, %48 : vector<16x256xf32>
    %c0_32 = arith.constant 0 : index
    %c0_33 = arith.constant 0 : index
    %c0_34 = arith.constant 0 : index
    %50 = vector.load %arg12[%c0_32, %c0_33, %c0_34] : memref<1x64x256xf32, #tpu.memory_space<vmem>>, vector<1x16x256xf32>
    %51 = vector.shape_cast %50 : vector<1x16x256xf32> to vector<16x256xf32>
    %52 = vector.shape_cast %49 : vector<16x256xf32> to vector<1x16x256xf32>
    tpu.vector_store %arg12[%c0_32, %c0_33, %c0_34], %52 {strides = array<i32>} : memref<1x64x256xf32, #tpu.memory_space<vmem>>, vector<1x16x256xf32>,
    %53 = vector.broadcast %38 : vector<8x1xf32> to vector<8x256xf32>
    %54 = arith.addf %28, %53 : vector<8x256xf32>
    %cst_35 = arith.constant 0.000000e+00 : f32
    %55 = vector.broadcast %cst_35 : f32 to vector<8x256xf32>
    %56 = arith.maximumf %54, %55 : vector<8x256xf32>
    %cst_36 = arith.constant dense<0.000000e+00> : vector<16x256xf32>
    %57 = tpu.matmul %39, %56, %cst_36 {dimension_numbers = #tpu.dot_dimension_numbers<[1], [0], [0], [1], [0, 0, 1, 1], [], []>} : vector<16x8xf32>, vector<8x256xf32>, vector<16x256xf32> -> vector<16x256xf32>
    %58 = vector.broadcast %40 : vector<16x1xf32> to vector<16x256xf32>
    %59 = arith.addf %57, %58 : vector<16x256xf32>
    %cst_37 = arith.constant 0.000000e+00 : f32
    %60 = vector.broadcast %cst_37 : f32 to vector<16x256xf32>
    %61 = arith.maximumf %59, %60 : vector<16x256xf32>
    %c0_38 = arith.constant 0 : index
    %c16 = arith.constant 16 : index
    %c0_39 = arith.constant 0 : index
    %62 = vector.load %arg12[%c0_38, %c16, %c0_39] : memref<1x64x256xf32, #tpu.memory_space<vmem>>, vector<1x16x256xf32>
    %63 = vector.shape_cast %62 : vector<1x16x256xf32> to vector<16x256xf32>
    %64 = vector.shape_cast %61 : vector<16x256xf32> to vector<1x16x256xf32>
    tpu.vector_store %arg12[%c0_38, %c16, %c0_39], %64 {strides = array<i32>} : memref<1x64x256xf32, #tpu.memory_space<vmem>>, vector<1x16x256xf32>,
    %65 = vector.broadcast %38 : vector<8x1xf32> to vector<8x256xf32>
    %66 = arith.addf %31, %65 : vector<8x256xf32>
    %cst_40 = arith.constant 0.000000e+00 : f32
    %67 = vector.broadcast %cst_40 : f32 to vector<8x256xf32>
    %68 = arith.maximumf %66, %67 : vector<8x256xf32>
    %cst_41 = arith.constant dense<0.000000e+00> : vector<16x256xf32>
    %69 = tpu.matmul %39, %68, %cst_41 {dimension_numbers = #tpu.dot_dimension_numbers<[1], [0], [0], [1], [0, 0, 1, 1], [], []>} : vector<16x8xf32>, vector<8x256xf32>, vector<16x256xf32> -> vector<16x256xf32>
    %70 = vector.broadcast %40 : vector<16x1xf32> to vector<16x256xf32>
    %71 = arith.addf %69, %70 : vector<16x256xf32>
    %cst_42 = arith.constant 0.000000e+00 : f32
    %72 = vector.broadcast %cst_42 : f32 to vector<16x256xf32>
    %73 = arith.maximumf %71, %72 : vector<16x256xf32>
    %c0_43 = arith.constant 0 : index
    %c32 = arith.constant 32 : index
    %c0_44 = arith.constant 0 : index
    %74 = vector.load %arg12[%c0_43, %c32, %c0_44] : memref<1x64x256xf32, #tpu.memory_space<vmem>>, vector<1x16x256xf32>
    %75 = vector.shape_cast %74 : vector<1x16x256xf32> to vector<16x256xf32>
    %76 = vector.shape_cast %73 : vector<16x256xf32> to vector<1x16x256xf32>
    tpu.vector_store %arg12[%c0_43, %c32, %c0_44], %76 {strides = array<i32>} : memref<1x64x256xf32, #tpu.memory_space<vmem>>, vector<1x16x256xf32>,
    %77 = vector.broadcast %38 : vector<8x1xf32> to vector<8x256xf32>
    %78 = arith.addf %37, %77 : vector<8x256xf32>
    %cst_45 = arith.constant 0.000000e+00 : f32
    %79 = vector.broadcast %cst_45 : f32 to vector<8x256xf32>
    %80 = arith.maximumf %78, %79 : vector<8x256xf32>
    %cst_46 = arith.constant dense<0.000000e+00> : vector<16x256xf32>
    %81 = tpu.matmul %39, %80, %cst_46 {dimension_numbers = #tpu.dot_dimension_numbers<[1], [0], [0], [1], [0, 0, 1, 1], [], []>} : vector<16x8xf32>, vector<8x256xf32>, vector<16x256xf32> -> vector<16x256xf32>
    %82 = vector.broadcast %40 : vector<16x1xf32> to vector<16x256xf32>
    %83 = arith.addf %81, %82 : vector<16x256xf32>
    %cst_47 = arith.constant 0.000000e+00 : f32
    %84 = vector.broadcast %cst_47 : f32 to vector<16x256xf32>
    %85 = arith.maximumf %83, %84 : vector<16x256xf32>
    %c0_48 = arith.constant 0 : index
    %c48 = arith.constant 48 : index
    %c0_49 = arith.constant 0 : index
    %86 = vector.load %arg12[%c0_48, %c48, %c0_49] : memref<1x64x256xf32, #tpu.memory_space<vmem>>, vector<1x16x256xf32>
    %87 = vector.shape_cast %86 : vector<1x16x256xf32> to vector<16x256xf32>
    %88 = vector.shape_cast %85 : vector<16x256xf32> to vector<1x16x256xf32>
    tpu.vector_store %arg12[%c0_48, %c48, %c0_49], %88 {strides = array<i32>} : memref<1x64x256xf32, #tpu.memory_space<vmem>>, vector<1x16x256xf32>,
    return
  }
  func.func @transform_0(%arg0: i32) -> (i32, i32, i32) {
    %c0_i32 = arith.constant 0 : i32
    %c0_i32_0 = arith.constant 0 : i32
    %c0_i32_1 = arith.constant 0 : i32
    return %arg0, %c0_i32, %c0_i32_0 : i32, i32, i32
  }
  func.func @transform_1(%arg0: i32) -> (i32, i32) {
    %c0_i32 = arith.constant 0 : i32
    %c0_i32_0 = arith.constant 0 : i32
    %c0_i32_1 = arith.constant 0 : i32
    return %c0_i32, %c0_i32_0 : i32, i32
  }
  func.func @transform_2(%arg0: i32) -> (i32, i32) {
    %c0_i32 = arith.constant 0 : i32
    %c0_i32_0 = arith.constant 0 : i32
    %c0_i32_1 = arith.constant 0 : i32
    return %c0_i32, %c0_i32_0 : i32, i32
  }
  func.func @transform_3(%arg0: i32) -> (i32, i32) {
    %c0_i32 = arith.constant 0 : i32
    %c0_i32_0 = arith.constant 0 : i32
    %c0_i32_1 = arith.constant 0 : i32
    return %c0_i32, %c0_i32_0 : i32, i32
  }
  func.func @transform_4(%arg0: i32) -> (i32, i32) {
    %c0_i32 = arith.constant 0 : i32
    %c0_i32_0 = arith.constant 0 : i32
    %c0_i32_1 = arith.constant 0 : i32
    return %c0_i32, %c0_i32_0 : i32, i32
  }
  func.func @transform_5(%arg0: i32) -> (i32, i32) {
    %c0_i32 = arith.constant 0 : i32
    %c0_i32_0 = arith.constant 0 : i32
    %c0_i32_1 = arith.constant 0 : i32
    return %c0_i32, %c0_i32_0 : i32, i32
  }
  func.func @transform_6(%arg0: i32) -> (i32, i32) {
    %c0_i32 = arith.constant 0 : i32
    %c0_i32_0 = arith.constant 0 : i32
    %c0_i32_1 = arith.constant 0 : i32
    return %c0_i32, %c0_i32_0 : i32, i32
  }
  func.func @transform_7(%arg0: i32) -> (i32, i32) {
    %c0_i32 = arith.constant 0 : i32
    %c0_i32_0 = arith.constant 0 : i32
    %c0_i32_1 = arith.constant 0 : i32
    return %c0_i32, %c0_i32_0 : i32, i32
  }
  func.func @transform_8(%arg0: i32) -> (i32, i32) {
    %c0_i32 = arith.constant 0 : i32
    %c0_i32_0 = arith.constant 0 : i32
    %c0_i32_1 = arith.constant 0 : i32
    return %c0_i32, %c0_i32_0 : i32, i32
  }
  func.func @transform_9(%arg0: i32) -> (i32, i32) {
    %c0_i32 = arith.constant 0 : i32
    %c0_i32_0 = arith.constant 0 : i32
    %c0_i32_1 = arith.constant 0 : i32
    return %c0_i32, %c0_i32_0 : i32, i32
  }
  func.func @transform_10(%arg0: i32) -> (i32, i32) {
    %c0_i32 = arith.constant 0 : i32
    %c0_i32_0 = arith.constant 0 : i32
    %c0_i32_1 = arith.constant 0 : i32
    return %c0_i32, %c0_i32_0 : i32, i32
  }
  func.func @transform_11(%arg0: i32) -> (i32, i32, i32) {
    %c0_i32 = arith.constant 0 : i32
    %c0_i32_0 = arith.constant 0 : i32
    %c0_i32_1 = arith.constant 0 : i32
    return %arg0, %c0_i32, %c0_i32_0 : i32, i32, i32
  }
}

</mosaic_0001>

<llo_original>
// kernel: tpu_custom_call.1
$region0: #{tpu_custom_call.1}
  #allocation0 [shape = 'u32[]', space=smem, size = 0x4, offset = 0x4, fixed_abs, tag = 'smem constant byte address 0x4 - core index']
  #allocation1 [shape = 'u32[144,128]{1,0:T(1,128)}', space=vmem, size = 0x12000, scoped, tag = 'internal scratch']
  %s0 = inlined_call_operand.vmem [shape: f32[2,32,256], index: 0, kind: input, shape index: {}]
  %s1 = inlined_call_operand.hbm [shape: f32[16,256], index: 1, kind: input, shape index: {}]
  %s2 = inlined_call_operand.hbm [shape: f32[8,32], index: 2, kind: input, shape index: {}]
  %s3 = inlined_call_operand.vmem [shape: f32[8,1], index: 3, kind: input, shape index: {}]
  %s4 = inlined_call_operand.vmem [shape: f32[32,8], index: 4, kind: input, shape index: {}]
  %s5 = inlined_call_operand.vmem [shape: f32[16,8], index: 5, kind: input, shape index: {}]
  %s6 = inlined_call_operand.vmem [shape: f32[16,8], index: 6, kind: input, shape index: {}]
  %s7 = inlined_call_operand.hbm [shape: f32[8,8], index: 7, kind: input, shape index: {}]
  %s8 = inlined_call_operand.vmem [shape: f32[8,1], index: 8, kind: input, shape index: {}]
  %s9 = inlined_call_operand.vmem [shape: f32[16,8], index: 9, kind: input, shape index: {}]
  %s10 = inlined_call_operand.vmem [shape: f32[16,1], index: 10, kind: input, shape index: {}]
  %s11 = inlined_call_operand.hbm [shape: f32[2,64,256], index: 11, kind: output, shape index: {}]
  %s12 = sld [smem:[#allocation0]]
  $region89: #{tpu_custom_call.1} parent=0
    _
  %s14 = ssub.s32 1, %s12
  %s15 = scalar_select 0, %s14, %s12
  $region1: #{tpu_custom_call.1} parent=0
    #allocation2 [shape = 'u8[16384]{0}', space=vmem, size = 0x4000, scoped, tag = 'input window, operand 1, single buffered']
    #allocation3 [shape = 's32[2]{0}', space=sflag, size = 0x8, scoped, tag = 'scoped memory for tpu_custom_call.1']
    #allocation4 [shape = 's32[2]{0}', space=sflag, size = 0x8, scoped, tag = 'scoped memory for tpu_custom_call.1']
    #allocation5 [shape = 'u8[4096]{0}', space=vmem, size = 0x1000, scoped, tag = 'input window, operand 2, single buffered']
    #allocation6 [shape = 's32[1]{0}', space=sflag, size = 0x4, scoped, tag = 'scoped memory for tpu_custom_call.1']
    #allocation7 [shape = 'u8[4096]{0}', space=vmem, size = 0x1000, scoped, tag = 'input window, operand 7, single buffered']
    #allocation8 [shape = 'u8[131072]{0}', space=vmem, size = 0x20000, scoped, tag = 'output window, operand 0']
    %16 = vsyncpa [#allocation3], 0
    %17 = vsyncpa [#allocation6], 0
    %18 = vsyncpa [#allocation4], 0
    %s19 = scalar_lea.sflag [#allocation4], 1
    %20 = vsyncpa %s19, 0
    loop: start=0, step=1, limit=4
    $region2: #{tpu_custom_call.1} parent=1 // loop_pre_header
      _
    $region3: #{tpu_custom_call.1} parent=1 // loop_header
      %s22 = sphi 0, %s26
      %p23 = scmp.ge.s32.totalorder %s22, 4
      %s32 = sphi 0, %s34
      %s35 = sphi 0, %s32
      %s36 = sphi 0, %s35
      %s52 = sphi 0, %s36
      %s56 = sphi 0, %s56
      %s58 = sphi 0, %s56
      %s59 = sphi 0, %s58
      %s73 = sphi 0, %s59
      %s77 = sphi 0, %s77
      %s79 = sphi 0, %s77
      %s80 = sphi 0, %s79
      %s94 = sphi 0, %s80
      %s98 = sphi 0, %s98
      %s100 = sphi 0, %s98
      %s101 = sphi 0, %s100
      %s115 = sphi 0, %s101
      %s119 = sphi 0, %s119
      %s121 = sphi 0, %s119
      %s122 = sphi 0, %s121
      %s136 = sphi 0, %s122
      %s140 = sphi 0, %s140
      %s142 = sphi 0, %s140
      %s143 = sphi 0, %s142
      %s157 = sphi 0, %s143
      %s161 = sphi 0, %s161
      %s163 = sphi 0, %s161
      %s164 = sphi 0, %s163
      %s178 = sphi 0, %s164
      %s182 = sphi 0, %s182
      %s184 = sphi 0, %s182
      %s185 = sphi 0, %s184
      %s199 = sphi 0, %s185
      %s203 = sphi 0, %s203
      %s205 = sphi 0, %s203
      %s206 = sphi 0, %s205
      %s220 = sphi 0, %s206
      %s224 = sphi 0, %s224
      %s226 = sphi 0, %s224
      %s227 = sphi 0, %s226
      %s241 = sphi 0, %s227
      %s245 = sphi 0, %s245
      %s247 = sphi 0, %s245
      %s248 = sphi 0, %s247
      %s262 = sphi 0, %s248
      %s268 = sphi 0, %s270
      %s271 = sphi 0, %s268
      %s272 = sphi 0, %s271
      %s288 = sphi 0, %s272
    $region4: #{tpu_custom_call.1} parent=1 // loop_header_branch
      %25 = sbr.rel (%p23) target = $region8
    $region5: #{tpu_custom_call.1} parent=1 // loop_body
      %s27 = ssub.s32 %s22, 1
      %s28 = ssub.s32 %s22, 2
      %s29 = sadd.s32 %s22, 1
      %s30 = ssub.s32 %s22, %s29
      %p31 = scmp.eq.s32.totalorder %s30, 0
      %s33 = sadd.s32 %s32, 1
      %s34 = scalar_select %p31, %s32, %s33
      %p37 = pneg %p31
      %p38 = scmp.eq.s32.totalorder %s22, 1
      %p39 = por %p37, %p38
      %p40 = scmp.ne.s32.totalorder %s32, %s35
      %p41 = scmp.eq.s32.totalorder %s22, 0
      %p42 = por %p40, %p41
      %p43 = scmp.ne.s32.totalorder %s32, %s35
      %p44 = scmp.eq.s32.totalorder %s27, 1
      %p45 = por %p43, %p44
      %p46 = scmp.ne.s32.totalorder %s35, %s36
      %p47 = scmp.eq.s32.totalorder %s27, 0
      %p48 = por %p46, %p47
      %p49 = scmp.ne.s32.totalorder %s35, %s36
      %p50 = scmp.eq.s32.totalorder %s28, 1
      %p51 = por %p49, %p50
      %p53 = scmp.ne.s32.totalorder %s36, %s52
      %p54 = scmp.eq.s32.totalorder %s28, 0
      %p55 = por %p53, %p54
      %s57 = sadd.s32 %s56, 1
      %p60 = scmp.eq.s32.totalorder %s22, 1
      %p61 = scmp.ne.s32.totalorder %s56, %s58
      %p62 = scmp.eq.s32.totalorder %s22, 0
      %p63 = por %p61, %p62
      %p64 = scmp.ne.s32.totalorder %s56, %s58
      %p65 = scmp.eq.s32.totalorder %s27, 1
      %p66 = por %p64, %p65
      %p67 = scmp.ne.s32.totalorder %s58, %s59
      %p68 = scmp.eq.s32.totalorder %s27, 0
      %p69 = por %p67, %p68
      %p70 = scmp.ne.s32.totalorder %s58, %s59
      %p71 = scmp.eq.s32.totalorder %s28, 1
      %p72 = por %p70, %p71
      %p74 = scmp.ne.s32.totalorder %s59, %s73
      %p75 = scmp.eq.s32.totalorder %s28, 0
      %p76 = por %p74, %p75
      %s78 = sadd.s32 %s77, 1
      %p81 = scmp.eq.s32.totalorder %s22, 1
      %p82 = scmp.ne.s32.totalorder %s77, %s79
      %p83 = scmp.eq.s32.totalorder %s22, 0
      %p84 = por %p82, %p83
      %p85 = scmp.ne.s32.totalorder %s77, %s79
      %p86 = scmp.eq.s32.totalorder %s27, 1
      %p87 = por %p85, %p86
      %p88 = scmp.ne.s32.totalorder %s79, %s80
      %p89 = scmp.eq.s32.totalorder %s27, 0
      %p90 = por %p88, %p89
      %p91 = scmp.ne.s32.totalorder %s79, %s80
      %p92 = scmp.eq.s32.totalorder %s28, 1
      %p93 = por %p91, %p92
      %p95 = scmp.ne.s32.totalorder %s80, %s94
      %p96 = scmp.eq.s32.totalorder %s28, 0
      %p97 = por %p95, %p96
      %s99 = sadd.s32 %s98, 1
      %p102 = scmp.eq.s32.totalorder %s22, 1
      %p103 = scmp.ne.s32.totalorder %s98, %s100
      %p104 = scmp.eq.s32.totalorder %s22, 0
      %p105 = por %p103, %p104
      %p106 = scmp.ne.s32.totalorder %s98, %s100
      %p107 = scmp.eq.s32.totalorder %s27, 1
      %p108 = por %p106, %p107
      %p109 = scmp.ne.s32.totalorder %s100, %s101
      %p110 = scmp.eq.s32.totalorder %s27, 0
      %p111 = por %p109, %p110
      %p112 = scmp.ne.s32.totalorder %s100, %s101
      %p113 = scmp.eq.s32.totalorder %s28, 1
      %p114 = por %p112, %p113
      %p116 = scmp.ne.s32.totalorder %s101, %s115
      %p117 = scmp.eq.s32.totalorder %s28, 0
      %p118 = por %p116, %p117
      %s120 = sadd.s32 %s119, 1
      %p123 = scmp.eq.s32.totalorder %s22, 1
      %p124 = scmp.ne.s32.totalorder %s119, %s121
      %p125 = scmp.eq.s32.totalorder %s22, 0
      %p126 = por %p124, %p125
      %p127 = scmp.ne.s32.totalorder %s119, %s121
      %p128 = scmp.eq.s32.totalorder %s27, 1
      %p129 = por %p127, %p128
      %p130 = scmp.ne.s32.totalorder %s121, %s122
      %p131 = scmp.eq.s32.totalorder %s27, 0
      %p132 = por %p130, %p131
      %p133 = scmp.ne.s32.totalorder %s121, %s122
      %p134 = scmp.eq.s32.totalorder %s28, 1
      %p135 = por %p133, %p134
      %p137 = scmp.ne.s32.totalorder %s122, %s136
      %p138 = scmp.eq.s32.totalorder %s28, 0
      %p139 = por %p137, %p138
      %s141 = sadd.s32 %s140, 1
      %p144 = scmp.eq.s32.totalorder %s22, 1
      %p145 = scmp.ne.s32.totalorder %s140, %s142
      %p146 = scmp.eq.s32.totalorder %s22, 0
      %p147 = por %p145, %p146
      %p148 = scmp.ne.s32.totalorder %s140, %s142
      %p149 = scmp.eq.s32.totalorder %s27, 1
      %p150 = por %p148, %p149
      %p151 = scmp.ne.s32.totalorder %s142, %s143
      %p152 = scmp.eq.s32.totalorder %s27, 0
      %p153 = por %p151, %p152
      %p154 = scmp.ne.s32.totalorder %s142, %s143
      %p155 = scmp.eq.s32.totalorder %s28, 1
      %p156 = por %p154, %p155
      %p158 = scmp.ne.s32.totalorder %s143, %s157
      %p159 = scmp.eq.s32.totalorder %s28, 0
      %p160 = por %p158, %p159
      %s162 = sadd.s32 %s161, 1
      %p165 = scmp.eq.s32.totalorder %s22, 1
      %p166 = scmp.ne.s32.totalorder %s161, %s163
      %p167 = scmp.eq.s32.totalorder %s22, 0
      %p168 = por %p166, %p167
      %p169 = scmp.ne.s32.totalorder %s161, %s163
      %p170 = scmp.eq.s32.totalorder %s27, 1
      %p171 = por %p169, %p170
      %p172 = scmp.ne.s32.totalorder %s163, %s164
      %p173 = scmp.eq.s32.totalorder %s27, 0
      %p174 = por %p172, %p173
      %p175 = scmp.ne.s32.totalorder %s163, %s164
      %p176 = scmp.eq.s32.totalorder %s28, 1
      %p177 = por %p175, %p176
      %p179 = scmp.ne.s32.totalorder %s164, %s178
      %p180 = scmp.eq.s32.totalorder %s28, 0
      %p181 = por %p179, %p180
      %s183 = sadd.s32 %s182, 1
      %p186 = scmp.eq.s32.totalorder %s22, 1
      %p187 = scmp.ne.s32.totalorder %s182, %s184
      %p188 = scmp.eq.s32.totalorder %s22, 0
      %p189 = por %p187, %p188
      %p190 = scmp.ne.s32.totalorder %s182, %s184
      %p191 = scmp.eq.s32.totalorder %s27, 1
      %p192 = por %p190, %p191
      %p193 = scmp.ne.s32.totalorder %s184, %s185
      %p194 = scmp.eq.s32.totalorder %s27, 0
      %p195 = por %p193, %p194
      %p196 = scmp.ne.s32.totalorder %s184, %s185
      %p197 = scmp.eq.s32.totalorder %s28, 1
      %p198 = por %p196, %p197
      %p200 = scmp.ne.s32.totalorder %s185, %s199
      %p201 = scmp.eq.s32.totalorder %s28, 0
      %p202 = por %p200, %p201
      %s204 = sadd.s32 %s203, 1
      %p207 = scmp.eq.s32.totalorder %s22, 1
      %p208 = scmp.ne.s32.totalorder %s203, %s205
      %p209 = scmp.eq.s32.totalorder %s22, 0
      %p210 = por %p208, %p209
      %p211 = scmp.ne.s32.totalorder %s203, %s205
      %p212 = scmp.eq.s32.totalorder %s27, 1
      %p213 = por %p211, %p212
      %p214 = scmp.ne.s32.totalorder %s205, %s206
      %p215 = scmp.eq.s32.totalorder %s27, 0
      %p216 = por %p214, %p215
      %p217 = scmp.ne.s32.totalorder %s205, %s206
      %p218 = scmp.eq.s32.totalorder %s28, 1
      %p219 = por %p217, %p218
      %p221 = scmp.ne.s32.totalorder %s206, %s220
      %p222 = scmp.eq.s32.totalorder %s28, 0
      %p223 = por %p221, %p222
      %s225 = sadd.s32 %s224, 1
      %p228 = scmp.eq.s32.totalorder %s22, 1
      %p229 = scmp.ne.s32.totalorder %s224, %s226
      %p230 = scmp.eq.s32.totalorder %s22, 0
      %p231 = por %p229, %p230
      %p232 = scmp.ne.s32.totalorder %s224, %s226
      %p233 = scmp.eq.s32.totalorder %s27, 1
      %p234 = por %p232, %p233
      %p235 = scmp.ne.s32.totalorder %s226, %s227
      %p236 = scmp.eq.s32.totalorder %s27, 0
      %p237 = por %p235, %p236
      %p238 = scmp.ne.s32.totalorder %s226, %s227
      %p239 = scmp.eq.s32.totalorder %s28, 1
      %p240 = por %p238, %p239
      %p242 = scmp.ne.s32.totalorder %s227, %s241
      %p243 = scmp.eq.s32.totalorder %s28, 0
      %p244 = por %p242, %p243
      %s246 = sadd.s32 %s245, 1
      %p249 = scmp.eq.s32.totalorder %s22, 1
      %p250 = scmp.ne.s32.totalorder %s245, %s247
      %p251 = scmp.eq.s32.totalorder %s22, 0
      %p252 = por %p250, %p251
      %p253 = scmp.ne.s32.totalorder %s245, %s247
      %p254 = scmp.eq.s32.totalorder %s27, 1
      %p255 = por %p253, %p254
      %p256 = scmp.ne.s32.totalorder %s247, %s248
      %p257 = scmp.eq.s32.totalorder %s27, 0
      %p258 = por %p256, %p257
      %p259 = scmp.ne.s32.totalorder %s247, %s248
      %p260 = scmp.eq.s32.totalorder %s28, 1
      %p261 = por %p259, %p260
      %p263 = scmp.ne.s32.totalorder %s248, %s262
      %p264 = scmp.eq.s32.totalorder %s28, 0
      %p265 = por %p263, %p264
      %s266 = ssub.s32 %s22, %s29
      %p267 = scmp.eq.s32.totalorder %s266, 0
      %s269 = sadd.s32 %s268, 1
      %s270 = scalar_select %p267, %s268, %s269
      %p273 = pneg %p267
      %p274 = scmp.eq.s32.totalorder %s22, 1
      %p275 = por %p273, %p274
      %p276 = scmp.ne.s32.totalorder %s268, %s271
      %p277 = scmp.eq.s32.totalorder %s22, 0
      %p278 = por %p276, %p277
      %p279 = scmp.ne.s32.totalorder %s268, %s271
      %p280 = scmp.eq.s32.totalorder %s27, 1
      %p281 = por %p279, %p280
      %p282 = scmp.ne.s32.totalorder %s271, %s272
      %p283 = scmp.eq.s32.totalorder %s27, 0
      %p284 = por %p282, %p283
      %p285 = scmp.ne.s32.totalorder %s271, %s272
      %p286 = scmp.eq.s32.totalorder %s28, 1
      %p287 = por %p285, %p286
      %p289 = scmp.ne.s32.totalorder %s272, %s288
      %p290 = scmp.eq.s32.totalorder %s28, 0
      %p291 = por %p289, %p290
      %p292 = scmp.le.s32.totalorder 1, %s22
      %p293 = scmp.lt.s32.totalorder %s22, 3
      %p294 = pnand %p292, %p293
      %p295 = pneg %p294
      // Predicated region
      $region9: #{tpu_custom_call.1} parent=5 // pred_check
        _
      $region10: #{tpu_custom_call.1} parent=5 // pred_check_branch
        %297 = sbr.rel (%p294) target = $region12
      $region11: #{tpu_custom_call.1} parent=5 // pred_region
        %s298 = ssub.s32 %s22, 1
        // Predicated region
        $region13: #{tpu_custom_call.1} parent=11 // pred_check
          %p299 = pneg %p69
        $region14: #{tpu_custom_call.1} parent=11 // pred_check_branch
          %301 = sbr.rel (%p299) target = $region16
        $region15: #{tpu_custom_call.1} parent=11 // pred_region
          %s303 = ssub.s32 512, 512
          %304 = vsyncadd [#allocation3], %s303
          %s305 = sshll.u32 [#allocation2], 4
          %s306 = int_to_ptr.vmem [resolvable:$true] %s305
          %311 = dma.hbm_to_vmem [thread:$0]  %s1, 512, %s306, [#allocation3], 256, 256, 16
        $region16: #{tpu_custom_call.1} parent=11 // pred_fallthru
          _
        // Predicated region
        $region17: #{tpu_custom_call.1} parent=11 // pred_check
          %p312 = pneg %p90
        $region18: #{tpu_custom_call.1} parent=11 // pred_check_branch
          %314 = sbr.rel (%p312) target = $region20
        $region19: #{tpu_custom_call.1} parent=11 // pred_region
          %s316 = ssub.s32 128, 128
          %317 = vsyncadd [#allocation6], %s316
          %s319 = sshll.u32 [#allocation5], 4
          %s320 = int_to_ptr.vmem [resolvable:$true] %s319
          %322 = dma.hbm_to_vmem [thread:$0]  %s2, 128, %s320, [#allocation6]
        $region20: #{tpu_custom_call.1} parent=11 // pred_fallthru
          _
        // Predicated region
        $region21: #{tpu_custom_call.1} parent=11 // pred_check
          %p323 = pneg %p111
        $region22: #{tpu_custom_call.1} parent=11 // pred_check_branch
          %325 = sbr.rel (%p323) target = $region24
        $region23: #{tpu_custom_call.1} parent=11 // pred_region
          _
        $region24: #{tpu_custom_call.1} parent=11 // pred_fallthru
          _
        // Predicated region
        $region25: #{tpu_custom_call.1} parent=11 // pred_check
          %p326 = pneg %p132
        $region26: #{tpu_custom_call.1} parent=11 // pred_check_branch
          %328 = sbr.rel (%p326) target = $region28
        $region27: #{tpu_custom_call.1} parent=11 // pred_region
          _
        $region28: #{tpu_custom_call.1} parent=11 // pred_fallthru
          _
        // Predicated region
        $region29: #{tpu_custom_call.1} parent=11 // pred_check
          %p329 = pneg %p153
        $region30: #{tpu_custom_call.1} parent=11 // pred_check_branch
          %331 = sbr.rel (%p329) target = $region32
        $region31: #{tpu_custom_call.1} parent=11 // pred_region
          _
        $region32: #{tpu_custom_call.1} parent=11 // pred_fallthru
          _
        // Predicated region
        $region33: #{tpu_custom_call.1} parent=11 // pred_check
          %p332 = pneg %p174
        $region34: #{tpu_custom_call.1} parent=11 // pred_check_branch
          %334 = sbr.rel (%p332) target = $region36
        $region35: #{tpu_custom_call.1} parent=11 // pred_region
          _
        $region36: #{tpu_custom_call.1} parent=11 // pred_fallthru
          _
        // Predicated region
        $region37: #{tpu_custom_call.1} parent=11 // pred_check
          %p335 = pneg %p195
        $region38: #{tpu_custom_call.1} parent=11 // pred_check_branch
          %337 = sbr.rel (%p335) target = $region40
        $region39: #{tpu_custom_call.1} parent=11 // pred_region
          %s339 = ssub.s32 128, 128
          %340 = vsyncadd [#allocation6], %s339
          %s342 = sshll.u32 [#allocation7], 4
          %s343 = int_to_ptr.vmem [resolvable:$true] %s342
          %345 = dma.hbm_to_vmem [thread:$0]  %s7, 128, %s343, [#allocation6]
        $region40: #{tpu_custom_call.1} parent=11 // pred_fallthru
          _
        // Predicated region
        $region41: #{tpu_custom_call.1} parent=11 // pred_check
          %p346 = pneg %p216
        $region42: #{tpu_custom_call.1} parent=11 // pred_check_branch
          %348 = sbr.rel (%p346) target = $region44
        $region43: #{tpu_custom_call.1} parent=11 // pred_region
          _
        $region44: #{tpu_custom_call.1} parent=11 // pred_fallthru
          _
        // Predicated region
        $region45: #{tpu_custom_call.1} parent=11 // pred_check
          %p349 = pneg %p237
        $region46: #{tpu_custom_call.1} parent=11 // pred_check_branch
          %351 = sbr.rel (%p349) target = $region48
        $region47: #{tpu_custom_call.1} parent=11 // pred_region
          _
        $region48: #{tpu_custom_call.1} parent=11 // pred_fallthru
          _
        // Predicated region
        $region49: #{tpu_custom_call.1} parent=11 // pred_check
          %p352 = pneg %p258
        $region50: #{tpu_custom_call.1} parent=11 // pred_check_branch
          %354 = sbr.rel (%p352) target = $region52
        $region51: #{tpu_custom_call.1} parent=11 // pred_region
          _
        $region52: #{tpu_custom_call.1} parent=11 // pred_fallthru
          _
      $region12: #{tpu_custom_call.1} parent=5 // pred_fallthru
        _
      %p355 = scmp.lt.s32.totalorder %s22, 2
      // Predicated region
      $region53: #{tpu_custom_call.1} parent=5 // pred_check
        %p356 = pneg %p355
      $region54: #{tpu_custom_call.1} parent=5 // pred_check_branch
        %358 = sbr.rel (%p356) target = $region56
      $region55: #{tpu_custom_call.1} parent=5 // pred_region
        // Predicated region
        $region57: #{tpu_custom_call.1} parent=55 // pred_check
          %p359 = pneg %p42
        $region58: #{tpu_custom_call.1} parent=55 // pred_check_branch
          %361 = sbr.rel (%p359) target = $region60
        $region59: #{tpu_custom_call.1} parent=55 // pred_region
          %p362 = scmp.lt.s32.totalorder %s22, 1
          %s363 = scalar_select %p362, %s22, 1
          %s364 = smul.addr %s363, 8
          %s365 = smul.addr %s364, 8
          %s366 = scalar_lea.vmem %s0, %s365
        $region60: #{tpu_custom_call.1} parent=55 // pred_fallthru
          _
      $region56: #{tpu_custom_call.1} parent=5 // pred_fallthru
        _
      %p367 = scmp.le.s32.totalorder 1, %s22
      %p368 = scmp.lt.s32.totalorder %s22, 3
      %p369 = pnand %p367, %p368
      %p370 = pneg %p369
      // Predicated region
      $region61: #{tpu_custom_call.1} parent=5 // pred_check
        _
      $region62: #{tpu_custom_call.1} parent=5 // pred_check_branch
        %372 = sbr.rel (%p369) target = $region64
      $region63: #{tpu_custom_call.1} parent=5 // pred_region
        %s373 = ssub.s32 %s22, 1
        // Predicated region
        $region65: #{tpu_custom_call.1} parent=63 // pred_check
          %p374 = pneg %p69
        $region66: #{tpu_custom_call.1} parent=63 // pred_check_branch
          %376 = sbr.rel (%p374) target = $region68
        $region67: #{tpu_custom_call.1} parent=63 // pred_region
          %377 = dma.done [#allocation3], 512
        $region68: #{tpu_custom_call.1} parent=63 // pred_fallthru
          _
        // Predicated region
        $region69: #{tpu_custom_call.1} parent=63 // pred_check
          %p378 = pneg %p90
        $region70: #{tpu_custom_call.1} parent=63 // pred_check_branch
          %380 = sbr.rel (%p378) target = $region72
        $region71: #{tpu_custom_call.1} parent=63 // pred_region
          %381 = dma.done [#allocation6], 128
        $region72: #{tpu_custom_call.1} parent=63 // pred_fallthru
          _
        // Predicated region
        $region73: #{tpu_custom_call.1} parent=63 // pred_check
          %p382 = pneg %p195
        $region74: #{tpu_custom_call.1} parent=63 // pred_check_branch
          %384 = sbr.rel (%p382) target = $region76
        $region75: #{tpu_custom_call.1} parent=63 // pred_region
          %385 = dma.done [#allocation6], 128
        $region76: #{tpu_custom_call.1} parent=63 // pred_fallthru
          _
        %p386 = scmp.lt.s32.totalorder %s27, 1
        %s387 = scalar_select %p386, %s27, 1
        %s388 = smul.addr %s387, 8
        %s389 = smul.addr %s388, 8
        %s390 = scalar_lea.vmem %s0, %s389
        %p391 = pneg %p48
        %p392 = pneg %p45
        %p393 = pneg %p69
        %p394 = pneg %p66
        %p395 = pneg %p90
        %p396 = pneg %p87
        %p397 = pneg %p111
        %p398 = pneg %p108
        %p399 = pneg %p132
        %p400 = pneg %p129
        %p401 = pneg %p153
        %p402 = pneg %p150
        %p403 = pneg %p174
        %p404 = pneg %p171
        %p405 = pneg %p195
        %p406 = pneg %p192
        %p407 = pneg %p216
        %p408 = pneg %p213
        %p409 = pneg %p237
        %p410 = pneg %p234
        %p411 = pneg %p258
        %p412 = pneg %p255
        %p413 = pneg %p284
        %p414 = pneg %p281
        %s415 = sand.u32 %s271, 1
        %s416 = scalar_lea.sflag [#allocation4], %s415
        %s417 = sand.u32 %s271, 1
        %s418 = smul.addr %s417, 128
        %s419 = scalar_lea.vmem [#allocation8], %s418
        %p420 = scmp.lt.s32.totalorder %s27, 1
        %s421 = scalar_select %p420, %s27, 1
        %s422 = smul.addr %s421, 8
        %s423 = smul.addr %s422, 8
        %s424 = scalar_lea.vmem %s0, %s423
        %v425 = vld [vmem:[#allocation5] sm:$0xff]
        %v426 = vld [vmem:[%s424] sm:$0xff]
        %v427 = vld [vmem:[%s424 + $0x8] sm:$0xff]
        %v428 = vld [vmem:[%s424 + $0x10] sm:$0xff]
        %v429 = vld [vmem:[%s424 + $0x18] sm:$0xff]
        %v430 = vld [vmem:[%s424 + $0x20] sm:$0xff]
        %v431 = vld [vmem:[%s424 + $0x28] sm:$0xff]
        %v432 = vld [vmem:[%s424 + $0x30] sm:$0xff]
        %v433 = vld [vmem:[%s424 + $0x38] sm:$0xff]
        %v434 = vld [vmem:[%s3] sm:$0xff]
        %436 = vset.pattern.permute.xlu0 0
        %437 = vperm.xlu0 %436, %v434
        %v438 = vpop.permute.xlu0 %437
        %vm440 = vcmask 261120
        %v442 = vsel %vm440, %v425, 0
        %444 = vmatprep.subr.mxu0 0.0
        %445 = vmatpush1.msra.mxu0 0.0
        %446 = vmatprep.subr.mxu0 0.0
        %447 = vmatpush1.msra.mxu0 0.0
        %448 = vmatprep.subr.mxu0 0.0
        %449 = vmatpush1.msra.mxu0 0.0
        %450 = vmatprep.subr.mxu0 0.0
        %451 = vmatpush1.msra.mxu0 0.0
        %452 = vmatprep.subr.mxu0 0.0
        %453 = vmatpush1.msra.mxu0 0.0
        %454 = vmatprep.subr.mxu0 0.0
        %455 = vmatpush1.msra.mxu0 0.0
        %456 = vmatprep.subr.mxu0 0.0
        %457 = vmatpush1.msra.mxu0 0.0
        %458 = vmatprep.subr.mxu0 0.0
        %459 = vmatpush1.msra.mxu0 0.0
        %460 = vmatprep.subr.mxu0 0.0
        %461 = vmatpush1.msra.mxu0 0.0
        %462 = vmatprep.subr.mxu0 0.0
        %463 = vmatpush1.msra.mxu0 0.0
        %464 = vmatprep.subr.mxu0 0.0
        %465 = vmatpush1.msra.mxu0 0.0
        %466 = vmatprep.subr.mxu0 0.0
        %467 = vmatpush1.msra.mxu0 0.0
        %468 = vmatprep.subr.mxu0 %v433
        %469 = vmatpush1.msra.mxu0 %v432
        %470 = vmatprep.subr.mxu0 %v431
        %471 = vmatpush1.msra.mxu0 %v430
        %472 = vmatprep.subr.mxu0 %v429
        %473 = vmatpush1.msra.mxu0 %v428
        %474 = vmatprep.subr.mxu0 %v427
        %475 = vmatpush1.msra.mxu0 %v426
        %476 = vmatprep.subr.mxu0 0.0
        %477 = vmatpush2.msra.mxu0 0.0
        %478 = vmatprep.subr.mxu0 0.0
        %479 = vmatpush2.msra.mxu0 0.0
        %480 = vmatprep.subr.mxu0 0.0
        %481 = vmatpush2.msra.mxu0 0.0
        %482 = vmatprep.subr.mxu0 0.0
        %483 = vmatpush2.msra.mxu0 0.0
        %484 = vmatprep.subr.mxu0 0.0
        %485 = vmatpush2.msra.mxu0 0.0
        %486 = vmatprep.subr.mxu0 0.0
        %487 = vmatpush2.msra.mxu0 0.0
        %488 = vmatprep.subr.mxu0 0.0
        %489 = vmatpush2.msra.mxu0 0.0
        %490 = vmatprep.subr.mxu0 0.0
        %491 = vmatpush2.msra.mxu0 0.0
        %492 = vmatprep.subr.mxu0 0.0
        %493 = vmatpush2.msra.mxu0 0.0
        %494 = vmatprep.subr.mxu0 0.0
        %495 = vmatpush2.msra.mxu0 0.0
        %496 = vmatprep.subr.mxu0 0.0
        %497 = vmatpush2.msra.mxu0 0.0
        %498 = vmatprep.subr.mxu0 0.0
        %499 = vmatpush2.msra.mxu0 0.0
        %500 = vmatprep.subr.mxu0 0.0
        %501 = vmatpush2.msra.mxu0 0.0
        %502 = vmatprep.subr.mxu0 0.0
        %503 = vmatpush2.msra.mxu0 0.0
        %504 = vmatprep.subr.mxu0 0.0
        %505 = vmatpush2.msra.mxu0 0.0
        %506 = vmatprep.subr.mxu0 0.0
        %507 = vmatpush2.msra.mxu0 0.0
        %508 = vmatprep.mubr.f32.mxu0 0.0
        %509 = vmatmul.mubr.f32.gmra.mxu0 %v442
        %v510 = vpop.f32.mrf.mxu0
        %v511 = vadd.f32 %v438, %v510
        %v512 = vpop.f32.mrf.mxu0
        %v513 = vadd.f32 %v438, %v512
        %514 = vdwg.mxu0
        %v515 = vmax.f32 %v511, 0.0
        %v516 = vmax.f32 %v513, 0.0
        %v517 = vld [vmem:[#allocation2] sm:$0xff]
        %v518 = vld [vmem:[#allocation2 + $0x8] sm:$0xff]
        %v519 = vld [vmem:[#allocation2 + $0x10] sm:$0xff]
        %v520 = vld [vmem:[#allocation2 + $0x18] sm:$0xff]
        %521 = vrot.lane.b32.xlu0 %v515, 127
        %v522 = vpop.permute.xlu0 %521
        %523 = vrot.lane.b32.xlu0 %v516, 127
        %v524 = vpop.permute.xlu0 %523
        %v525 = vlaneseq
        %v526 = vand.u32 %v525, 127
        %vm527 = vcmp.lt.s32.totalorder %v526, 127
        %v528 = vsel %vm527, %v522, %v524
        %v529 = vsel %vm527, %v524, %v522
        %v530 = vmul.f32 %v528, %v517
        %v531 = vmul.f32 %v529, %v518
        %532 = vrot.lane.b32.xlu0 %v515, 112
        %v533 = vpop.permute.xlu0 %532
        %534 = vrot.lane.b32.xlu0 %v516, 112
        %v535 = vpop.permute.xlu0 %534
        %vm536 = vcmp.lt.s32.totalorder %v526, 112
        %v537 = vsel %vm536, %v533, %v535
        %v538 = vsel %vm536, %v535, %v533
        %v539 = vmul.f32 %v537, %v519
        %v540 = vmul.f32 %v538, %v520
        %541 = vrot.lane.b32.xlu0 %v539, 127
        %v542 = vpop.permute.xlu0 %541
        %543 = vrot.lane.b32.xlu0 %v540, 127
        %v544 = vpop.permute.xlu0 %543
        %v545 = vsel %vm527, %v542, %v544
        %v546 = vsel %vm527, %v544, %v542
        %v547 = vmul.f32 %v545, %v517
        %v548 = vmul.f32 %v546, %v518
        %v549 = vld [vmem:[%s4] sm:$0xff]
        %v550 = vld [vmem:[%s4 + $0x8] sm:$0xff]
        %v551 = vld [vmem:[%s4 + $0x10] sm:$0xff]
        %v552 = vld [vmem:[%s4 + $0x18] sm:$0xff]
        %vm553 = vcmask 64512
        %v555 = vsel %vm553, %v549, 0
        %v558 = vsel %vm553, %v550, 0
        %v561 = vsel %vm553, %v551, 0
        %v564 = vsel %vm553, %v552, 0
        %566 = vmatprep.subr.mxu0 0.0
        %567 = vmatpush1.msra.mxu0 0.0
        %568 = vmatprep.subr.mxu0 0.0
        %569 = vmatpush1.msra.mxu0 0.0
        %570 = vmatprep.subr.mxu0 0.0
        %571 = vmatpush1.msra.mxu0 0.0
        %572 = vmatprep.subr.mxu0 0.0
        %573 = vmatpush1.msra.mxu0 0.0
        %574 = vmatprep.subr.mxu0 0.0
        %575 = vmatpush1.msra.mxu0 0.0
        %576 = vmatprep.subr.mxu0 0.0
        %577 = vmatpush1.msra.mxu0 0.0
        %578 = vmatprep.subr.mxu0 0.0
        %579 = vmatpush1.msra.mxu0 0.0
        %580 = vmatprep.subr.mxu0 0.0
        %581 = vmatpush1.msra.mxu0 0.0
        %582 = vmatprep.subr.mxu0 0.0
        %583 = vmatpush1.msra.mxu0 0.0
        %584 = vmatprep.subr.mxu0 0.0
        %585 = vmatpush1.msra.mxu0 0.0
        %586 = vmatprep.subr.mxu0 0.0
        %587 = vmatpush1.msra.mxu0 0.0
        %588 = vmatprep.subr.mxu0 0.0
        %589 = vmatpush1.msra.mxu0 0.0
        %590 = vmatprep.subr.mxu0 0.0
        %591 = vmatpush1.msra.mxu0 0.0
        %592 = vmatprep.subr.mxu0 0.0
        %593 = vmatpush1.msra.mxu0 0.0
        %594 = vmatprep.subr.mxu0 0.0
        %595 = vmatpush1.msra.mxu0 0.0
        %596 = vmatprep.subr.mxu0 %v516
        %597 = vmatpush1.msra.mxu0 %v515
        %598 = vmatprep.subr.mxu0 0.0
        %599 = vmatpush2.msra.mxu0 0.0
        %600 = vmatprep.subr.mxu0 0.0
        %601 = vmatpush2.msra.mxu0 0.0
        %602 = vmatprep.subr.mxu0 0.0
        %603 = vmatpush2.msra.mxu0 0.0
        %604 = vmatprep.subr.mxu0 0.0
        %605 = vmatpush2.msra.mxu0 0.0
        %606 = vmatprep.subr.mxu0 0.0
        %607 = vmatpush2.msra.mxu0 0.0
        %608 = vmatprep.subr.mxu0 0.0
        %609 = vmatpush2.msra.mxu0 0.0
        %610 = vmatprep.subr.mxu0 0.0
        %611 = vmatpush2.msra.mxu0 0.0
        %612 = vmatprep.subr.mxu0 0.0
        %613 = vmatpush2.msra.mxu0 0.0
        %614 = vmatprep.subr.mxu0 0.0
        %615 = vmatpush2.msra.mxu0 0.0
        %616 = vmatprep.subr.mxu0 0.0
        %617 = vmatpush2.msra.mxu0 0.0
        %618 = vmatprep.subr.mxu0 0.0
        %619 = vmatpush2.msra.mxu0 0.0
        %620 = vmatprep.subr.mxu0 0.0
        %621 = vmatpush2.msra.mxu0 0.0
        %622 = vmatprep.subr.mxu0 0.0
        %623 = vmatpush2.msra.mxu0 0.0
        %624 = vmatprep.subr.mxu0 0.0
        %625 = vmatpush2.msra.mxu0 0.0
        %626 = vmatprep.subr.mxu0 0.0
        %627 = vmatpush2.msra.mxu0 0.0
        %628 = vmatprep.subr.mxu0 0.0
        %629 = vmatpush2.msra.mxu0 0.0
        %630 = vmatprep.mubr.f32.mxu0 0.0
        %631 = vmatmul.mubr.f32.gmra.mxu0 %v555
        %v632 = vpop.f32.mrf.mxu0
        %v633 = vadd.f32 0.0, %v632
        %v634 = vpop.f32.mrf.mxu0
        %v635 = vadd.f32 0.0, %v634
        %636 = vmatprep.mubr.f32.mxu0 0.0
        %637 = vmatmul.mubr.f32.gmra.mxu0 %v558
        %v638 = vpop.f32.mrf.mxu0
        %v639 = vadd.f32 0.0, %v638
        %v640 = vpop.f32.mrf.mxu0
        %v641 = vadd.f32 0.0, %v640
        %642 = vmatprep.mubr.f32.mxu0 0.0
        %643 = vmatmul.mubr.f32.gmra.mxu0 %v561
        %v644 = vpop.f32.mrf.mxu0
        %v645 = vadd.f32 0.0, %v644
        %v646 = vpop.f32.mrf.mxu0
        %v647 = vadd.f32 0.0, %v646
        %648 = vmatprep.mubr.f32.mxu0 0.0
        %649 = vmatmul.mubr.f32.gmra.mxu0 %v564
        %v650 = vpop.f32.mrf.mxu0
        %v651 = vadd.f32 0.0, %v650
        %v652 = vpop.f32.mrf.mxu0
        %v653 = vadd.f32 0.0, %v652
        %654 = vdwg.mxu0
        %v655 = vld [vmem:[%s5] sm:$0xff]
        %v656 = vld [vmem:[%s5 + $0x8] sm:$0xff]
        %v658 = vsel %vm553, %v655, 0
        %v661 = vsel %vm553, %v656, 0
        %663 = vmatprep.subr.mxu0 0.0
        %664 = vmatpush1.msra.mxu0 0.0
        %665 = vmatprep.subr.mxu0 0.0
        %666 = vmatpush1.msra.mxu0 0.0
        %667 = vmatprep.subr.mxu0 0.0
        %668 = vmatpush1.msra.mxu0 0.0
        %669 = vmatprep.subr.mxu0 0.0
        %670 = vmatpush1.msra.mxu0 0.0
        %671 = vmatprep.subr.mxu0 0.0
        %672 = vmatpush1.msra.mxu0 0.0
        %673 = vmatprep.subr.mxu0 0.0
        %674 = vmatpush1.msra.mxu0 0.0
        %675 = vmatprep.subr.mxu0 0.0
        %676 = vmatpush1.msra.mxu0 0.0
        %677 = vmatprep.subr.mxu0 0.0
        %678 = vmatpush1.msra.mxu0 0.0
        %679 = vmatprep.subr.mxu0 0.0
        %680 = vmatpush1.msra.mxu0 0.0
        %681 = vmatprep.subr.mxu0 0.0
        %682 = vmatpush1.msra.mxu0 0.0
        %683 = vmatprep.subr.mxu0 0.0
        %684 = vmatpush1.msra.mxu0 0.0
        %685 = vmatprep.subr.mxu0 0.0
        %686 = vmatpush1.msra.mxu0 0.0
        %687 = vmatprep.subr.mxu0 0.0
        %688 = vmatpush1.msra.mxu0 0.0
        %689 = vmatprep.subr.mxu0 0.0
        %690 = vmatpush1.msra.mxu0 0.0
        %691 = vmatprep.subr.mxu0 0.0
        %692 = vmatpush1.msra.mxu0 0.0
        %693 = vmatprep.subr.mxu0 %v531
        %694 = vmatpush1.msra.mxu0 %v530
        %695 = vmatprep.subr.mxu0 0.0
        %696 = vmatpush2.msra.mxu0 0.0
        %697 = vmatprep.subr.mxu0 0.0
        %698 = vmatpush2.msra.mxu0 0.0
        %699 = vmatprep.subr.mxu0 0.0
        %700 = vmatpush2.msra.mxu0 0.0
        %701 = vmatprep.subr.mxu0 0.0
        %702 = vmatpush2.msra.mxu0 0.0
        %703 = vmatprep.subr.mxu0 0.0
        %704 = vmatpush2.msra.mxu0 0.0
        %705 = vmatprep.subr.mxu0 0.0
        %706 = vmatpush2.msra.mxu0 0.0
        %707 = vmatprep.subr.mxu0 0.0
        %708 = vmatpush2.msra.mxu0 0.0
        %709 = vmatprep.subr.mxu0 0.0
        %710 = vmatpush2.msra.mxu0 0.0
        %711 = vmatprep.subr.mxu0 0.0
        %712 = vmatpush2.msra.mxu0 0.0
        %713 = vmatprep.subr.mxu0 0.0
        %714 = vmatpush2.msra.mxu0 0.0
        %715 = vmatprep.subr.mxu0 0.0
        %716 = vmatpush2.msra.mxu0 0.0
        %717 = vmatprep.subr.mxu0 0.0
        %718 = vmatpush2.msra.mxu0 0.0
        %719 = vmatprep.subr.mxu0 0.0
        %720 = vmatpush2.msra.mxu0 0.0
        %721 = vmatprep.subr.mxu0 0.0
        %722 = vmatpush2.msra.mxu0 0.0
        %723 = vmatprep.subr.mxu0 0.0
        %724 = vmatpush2.msra.mxu0 0.0
        %725 = vmatprep.subr.mxu0 0.0
        %726 = vmatpush2.msra.mxu0 0.0
        %727 = vmatprep.mubr.f32.mxu0 0.0
        %728 = vmatmul.mubr.f32.gmra.mxu0 %v658
        %v729 = vpop.f32.mrf.mxu0
        %v730 = vadd.f32 0.0, %v729
        %v731 = vpop.f32.mrf.mxu0
        %v732 = vadd.f32 0.0, %v731
        %733 = vmatprep.mubr.f32.mxu0 0.0
        %734 = vmatmul.mubr.f32.gmra.mxu0 %v661
        %v735 = vpop.f32.mrf.mxu0
        %v736 = vadd.f32 0.0, %v735
        %v737 = vpop.f32.mrf.mxu0
        %v738 = vadd.f32 0.0, %v737
        %739 = vdwg.mxu0
        %v740 = vld [vmem:[%s6] sm:$0xff]
        %v741 = vld [vmem:[%s6 + $0x8] sm:$0xff]
        %v743 = vsel %vm553, %v740, 0
        %v746 = vsel %vm553, %v741, 0
        %748 = vmatprep.subr.mxu0 0.0
        %749 = vmatpush1.msra.mxu0 0.0
        %750 = vmatprep.subr.mxu0 0.0
        %751 = vmatpush1.msra.mxu0 0.0
        %752 = vmatprep.subr.mxu0 0.0
        %753 = vmatpush1.msra.mxu0 0.0
        %754 = vmatprep.subr.mxu0 0.0
        %755 = vmatpush1.msra.mxu0 0.0
        %756 = vmatprep.subr.mxu0 0.0
        %757 = vmatpush1.msra.mxu0 0.0
        %758 = vmatprep.subr.mxu0 0.0
        %759 = vmatpush1.msra.mxu0 0.0
        %760 = vmatprep.subr.mxu0 0.0
        %761 = vmatpush1.msra.mxu0 0.0
        %762 = vmatprep.subr.mxu0 0.0
        %763 = vmatpush1.msra.mxu0 0.0
        %764 = vmatprep.subr.mxu0 0.0
        %765 = vmatpush1.msra.mxu0 0.0
        %766 = vmatprep.subr.mxu0 0.0
        %767 = vmatpush1.msra.mxu0 0.0
        %768 = vmatprep.subr.mxu0 0.0
        %769 = vmatpush1.msra.mxu0 0.0
        %770 = vmatprep.subr.mxu0 0.0
        %771 = vmatpush1.msra.mxu0 0.0
        %772 = vmatprep.subr.mxu0 0.0
        %773 = vmatpush1.msra.mxu0 0.0
        %774 = vmatprep.subr.mxu0 0.0
        %775 = vmatpush1.msra.mxu0 0.0
        %776 = vmatprep.subr.mxu0 0.0
        %777 = vmatpush1.msra.mxu0 0.0
        %778 = vmatprep.subr.mxu0 %v540
        %779 = vmatpush1.msra.mxu0 %v539
        %780 = vmatprep.subr.mxu0 0.0
        %781 = vmatpush2.msra.mxu0 0.0
        %782 = vmatprep.subr.mxu0 0.0
        %783 = vmatpush2.msra.mxu0 0.0
        %784 = vmatprep.subr.mxu0 0.0
        %785 = vmatpush2.msra.mxu0 0.0
        %786 = vmatprep.subr.mxu0 0.0
        %787 = vmatpush2.msra.mxu0 0.0
        %788 = vmatprep.subr.mxu0 0.0
        %789 = vmatpush2.msra.mxu0 0.0
        %790 = vmatprep.subr.mxu0 0.0
        %791 = vmatpush2.msra.mxu0 0.0
        %792 = vmatprep.subr.mxu0 0.0
        %793 = vmatpush2.msra.mxu0 0.0
        %794 = vmatprep.subr.mxu0 0.0
        %795 = vmatpush2.msra.mxu0 0.0
        %796 = vmatprep.subr.mxu0 0.0
        %797 = vmatpush2.msra.mxu0 0.0
        %798 = vmatprep.subr.mxu0 0.0
        %799 = vmatpush2.msra.mxu0 0.0
        %800 = vmatprep.subr.mxu0 0.0
        %801 = vmatpush2.msra.mxu0 0.0
        %802 = vmatprep.subr.mxu0 0.0
        %803 = vmatpush2.msra.mxu0 0.0
        %804 = vmatprep.subr.mxu0 0.0
        %805 = vmatpush2.msra.mxu0 0.0
        %806 = vmatprep.subr.mxu0 0.0
        %807 = vmatpush2.msra.mxu0 0.0
        %808 = vmatprep.subr.mxu0 0.0
        %809 = vmatpush2.msra.mxu0 0.0
        %810 = vmatprep.subr.mxu0 0.0
        %811 = vmatpush2.msra.mxu0 0.0
        %812 = vmatprep.mubr.f32.mxu0 0.0
        %813 = vmatmul.mubr.f32.gmra.mxu0 %v743
        %v814 = vpop.f32.mrf.mxu0
        %v815 = vadd.f32 0.0, %v814
        %v816 = vpop.f32.mrf.mxu0
        %v817 = vadd.f32 0.0, %v816
        %818 = vmatprep.mubr.f32.mxu0 0.0
        %819 = vmatmul.mubr.f32.gmra.mxu0 %v746
        %v820 = vpop.f32.mrf.mxu0
        %v821 = vadd.f32 0.0, %v820
        %v822 = vpop.f32.mrf.mxu0
        %v823 = vadd.f32 0.0, %v822
        %824 = vdwg.mxu0
        %v825 = vld [vmem:[#allocation7] sm:$0xff]
        %v827 = vsel %vm553, %v825, 0
        %829 = vmatprep.subr.mxu0 0.0
        %830 = vmatpush1.msra.mxu0 0.0
        %831 = vmatprep.subr.mxu0 0.0
        %832 = vmatpush1.msra.mxu0 0.0
        %833 = vmatprep.subr.mxu0 0.0
        %834 = vmatpush1.msra.mxu0 0.0
        %835 = vmatprep.subr.mxu0 0.0
        %836 = vmatpush1.msra.mxu0 0.0
        %837 = vmatprep.subr.mxu0 0.0
        %838 = vmatpush1.msra.mxu0 0.0
        %839 = vmatprep.subr.mxu0 0.0
        %840 = vmatpush1.msra.mxu0 0.0
        %841 = vmatprep.subr.mxu0 0.0
        %842 = vmatpush1.msra.mxu0 0.0
        %843 = vmatprep.subr.mxu0 0.0
        %844 = vmatpush1.msra.mxu0 0.0
        %845 = vmatprep.subr.mxu0 0.0
        %846 = vmatpush1.msra.mxu0 0.0
        %847 = vmatprep.subr.mxu0 0.0
        %848 = vmatpush1.msra.mxu0 0.0
        %849 = vmatprep.subr.mxu0 0.0
        %850 = vmatpush1.msra.mxu0 0.0
        %851 = vmatprep.subr.mxu0 0.0
        %852 = vmatpush1.msra.mxu0 0.0
        %853 = vmatprep.subr.mxu0 0.0
        %854 = vmatpush1.msra.mxu0 0.0
        %855 = vmatprep.subr.mxu0 0.0
        %856 = vmatpush1.msra.mxu0 0.0
        %857 = vmatprep.subr.mxu0 0.0
        %858 = vmatpush1.msra.mxu0 0.0
        %859 = vmatprep.subr.mxu0 %v548
        %860 = vmatpush1.msra.mxu0 %v547
        %861 = vmatprep.subr.mxu0 0.0
        %862 = vmatpush2.msra.mxu0 0.0
        %863 = vmatprep.subr.mxu0 0.0
        %864 = vmatpush2.msra.mxu0 0.0
        %865 = vmatprep.subr.mxu0 0.0
        %866 = vmatpush2.msra.mxu0 0.0
        %867 = vmatprep.subr.mxu0 0.0
        %868 = vmatpush2.msra.mxu0 0.0
        %869 = vmatprep.subr.mxu0 0.0
        %870 = vmatpush2.msra.mxu0 0.0
        %871 = vmatprep.subr.mxu0 0.0
        %872 = vmatpush2.msra.mxu0 0.0
        %873 = vmatprep.subr.mxu0 0.0
        %874 = vmatpush2.msra.mxu0 0.0
        %875 = vmatprep.subr.mxu0 0.0
        %876 = vmatpush2.msra.mxu0 0.0
        %877 = vmatprep.subr.mxu0 0.0
        %878 = vmatpush2.msra.mxu0 0.0
        %879 = vmatprep.subr.mxu0 0.0
        %880 = vmatpush2.msra.mxu0 0.0
        %881 = vmatprep.subr.mxu0 0.0
        %882 = vmatpush2.msra.mxu0 0.0
        %883 = vmatprep.subr.mxu0 0.0
        %884 = vmatpush2.msra.mxu0 0.0
        %885 = vmatprep.subr.mxu0 0.0
        %886 = vmatpush2.msra.mxu0 0.0
        %887 = vmatprep.subr.mxu0 0.0
        %888 = vmatpush2.msra.mxu0 0.0
        %889 = vmatprep.subr.mxu0 0.0
        %890 = vmatpush2.msra.mxu0 0.0
        %891 = vmatprep.subr.mxu0 0.0
        %892 = vmatpush2.msra.mxu0 0.0
        %893 = vmatprep.mubr.f32.mxu0 0.0
        %894 = vmatmul.mubr.f32.gmra.mxu0 %v827
        %v895 = vpop.f32.mrf.mxu0
        %v896 = vadd.f32 0.0, %v895
        %v897 = vpop.f32.mrf.mxu0
        %v898 = vadd.f32 0.0, %v897
        %899 = vdwg.mxu0
        %v900 = vadd.f32 %v639, %v730
        %v901 = vadd.f32 %v641, %v732
        %v902 = vadd.f32 %v645, %v815
        %v903 = vadd.f32 %v647, %v817
        %v904 = vadd.f32 %v651, %v736
        %v905 = vadd.f32 %v653, %v738
        %v906 = vadd.f32 %v904, %v821
        %v907 = vadd.f32 %v905, %v823
        %v908 = vadd.f32 %v906, %v896
        %v909 = vadd.f32 %v907, %v898
        %v910 = vld [vmem:[%s8] sm:$0xff]
        %v911 = vld [vmem:[%s9] sm:$0xff]
        %v912 = vld [vmem:[%s9 + $0x8] sm:$0xff]
        %v913 = vld [vmem:[%s10] sm:$0xff]
        %v914 = vld [vmem:[%s10 + $0x8] sm:$0xff]
        %916 = vset.pattern.permute.xlu0 0
        %917 = vperm.xlu0 %916, %v910
        %v918 = vpop.permute.xlu0 %917
        %v920 = vadd.f32 %v633, %v918
        %v921 = vadd.f32 %v635, %v918
        %v922 = vmax.f32 %v920, 0.0
        %v923 = vmax.f32 %v921, 0.0
        %925 = vset.pattern.permute.xlu0 0
        %926 = vperm.xlu0 %925, %v913
        %v927 = vpop.permute.xlu0 %926
        %930 = vset.pattern.permute.xlu0 0
        %931 = vperm.xlu0 %930, %v914
        %v932 = vpop.permute.xlu0 %931
        %v935 = vsel %vm553, %v911, 0
        %v938 = vsel %vm553, %v912, 0
        %940 = vmatprep.subr.mxu0 0.0
        %941 = vmatpush1.msra.mxu0 0.0
        %942 = vmatprep.subr.mxu0 0.0
        %943 = vmatpush1.msra.mxu0 0.0
        %944 = vmatprep.subr.mxu0 0.0
        %945 = vmatpush1.msra.mxu0 0.0
        %946 = vmatprep.subr.mxu0 0.0
        %947 = vmatpush1.msra.mxu0 0.0
        %948 = vmatprep.subr.mxu0 0.0
        %949 = vmatpush1.msra.mxu0 0.0
        %950 = vmatprep.subr.mxu0 0.0
        %951 = vmatpush1.msra.mxu0 0.0
        %952 = vmatprep.subr.mxu0 0.0
        %953 = vmatpush1.msra.mxu0 0.0
        %954 = vmatprep.subr.mxu0 0.0
        %955 = vmatpush1.msra.mxu0 0.0
        %956 = vmatprep.subr.mxu0 0.0
        %957 = vmatpush1.msra.mxu0 0.0
        %958 = vmatprep.subr.mxu0 0.0
        %959 = vmatpush1.msra.mxu0 0.0
        %960 = vmatprep.subr.mxu0 0.0
        %961 = vmatpush1.msra.mxu0 0.0
        %962 = vmatprep.subr.mxu0 0.0
        %963 = vmatpush1.msra.mxu0 0.0
        %964 = vmatprep.subr.mxu0 0.0
        %965 = vmatpush1.msra.mxu0 0.0
        %966 = vmatprep.subr.mxu0 0.0
        %967 = vmatpush1.msra.mxu0 0.0
        %968 = vmatprep.subr.mxu0 0.0
        %969 = vmatpush1.msra.mxu0 0.0
        %970 = vmatprep.subr.mxu0 %v923
        %971 = vmatpush1.msra.mxu0 %v922
        %972 = vmatprep.subr.mxu0 0.0
        %973 = vmatpush2.msra.mxu0 0.0
        %974 = vmatprep.subr.mxu0 0.0
        %975 = vmatpush2.msra.mxu0 0.0
        %976 = vmatprep.subr.mxu0 0.0
        %977 = vmatpush2.msra.mxu0 0.0
        %978 = vmatprep.subr.mxu0 0.0
        %979 = vmatpush2.msra.mxu0 0.0
        %980 = vmatprep.subr.mxu0 0.0
        %981 = vmatpush2.msra.mxu0 0.0
        %982 = vmatprep.subr.mxu0 0.0
        %983 = vmatpush2.msra.mxu0 0.0
        %984 = vmatprep.subr.mxu0 0.0
        %985 = vmatpush2.msra.mxu0 0.0
        %986 = vmatprep.subr.mxu0 0.0
        %987 = vmatpush2.msra.mxu0 0.0
        %988 = vmatprep.subr.mxu0 0.0
        %989 = vmatpush2.msra.mxu0 0.0
        %990 = vmatprep.subr.mxu0 0.0
        %991 = vmatpush2.msra.mxu0 0.0
        %992 = vmatprep.subr.mxu0 0.0
        %993 = vmatpush2.msra.mxu0 0.0
        %994 = vmatprep.subr.mxu0 0.0
        %995 = vmatpush2.msra.mxu0 0.0
        %996 = vmatprep.subr.mxu0 0.0
        %997 = vmatpush2.msra.mxu0 0.0
        %998 = vmatprep.subr.mxu0 0.0
        %999 = vmatpush2.msra.mxu0 0.0
        %1000 = vmatprep.subr.mxu0 0.0
        %1001 = vmatpush2.msra.mxu0 0.0
        %1002 = vmatprep.subr.mxu0 0.0
        %1003 = vmatpush2.msra.mxu0 0.0
        %1004 = vmatprep.mubr.f32.mxu0 0.0
        %1005 = vmatmul.mubr.f32.gmra.mxu0 %v935
        %v1006 = vpop.f32.mrf.mxu0
        %v1007 = vadd.f32 %v927, %v1006
        %v1008 = vpop.f32.mrf.mxu0
        %v1009 = vadd.f32 %v927, %v1008
        %1010 = vmatprep.mubr.f32.mxu0 0.0
        %1011 = vmatmul.mubr.f32.gmra.mxu0 %v938
        %v1012 = vpop.f32.mrf.mxu0
        %v1013 = vadd.f32 %v932, %v1012
        %v1014 = vpop.f32.mrf.mxu0
        %v1015 = vadd.f32 %v932, %v1014
        %1016 = vdwg.mxu0
        %v1017 = vmax.f32 %v1007, 0.0
        %v1018 = vmax.f32 %v1009, 0.0
        %v1019 = vmax.f32 %v1013, 0.0
        %v1020 = vmax.f32 %v1015, 0.0
        %1021 = vst [vmem:[%s419] sm:$0xff] %v1017
        %1022 = vst [vmem:[%s419 + $0x8] sm:$0xff] %v1018
        %1023 = vst [vmem:[%s419 + $0x10] sm:$0xff] %v1019
        %1024 = vst [vmem:[%s419 + $0x18] sm:$0xff] %v1020
        %v1025 = vadd.f32 %v900, %v918
        %v1026 = vadd.f32 %v901, %v918
        %v1027 = vmax.f32 %v1025, 0.0
        %v1028 = vmax.f32 %v1026, 0.0
        %1029 = vmatprep.subr.mxu0 0.0
        %1030 = vmatpush1.msra.mxu0 0.0
        %1031 = vmatprep.subr.mxu0 0.0
        %1032 = vmatpush1.msra.mxu0 0.0
        %1033 = vmatprep.subr.mxu0 0.0
        %1034 = vmatpush1.msra.mxu0 0.0
        %1035 = vmatprep.subr.mxu0 0.0
        %1036 = vmatpush1.msra.mxu0 0.0
        %1037 = vmatprep.subr.mxu0 0.0
        %1038 = vmatpush1.msra.mxu0 0.0
        %1039 = vmatprep.subr.mxu0 0.0
        %1040 = vmatpush1.msra.mxu0 0.0
        %1041 = vmatprep.subr.mxu0 0.0
        %1042 = vmatpush1.msra.mxu0 0.0
        %1043 = vmatprep.subr.mxu0 0.0
        %1044 = vmatpush1.msra.mxu0 0.0
        %1045 = vmatprep.subr.mxu0 0.0
        %1046 = vmatpush1.msra.mxu0 0.0
        %1047 = vmatprep.subr.mxu0 0.0
        %1048 = vmatpush1.msra.mxu0 0.0
        %1049 = vmatprep.subr.mxu0 0.0
        %1050 = vmatpush1.msra.mxu0 0.0
        %1051 = vmatprep.subr.mxu0 0.0
        %1052 = vmatpush1.msra.mxu0 0.0
        %1053 = vmatprep.subr.mxu0 0.0
        %1054 = vmatpush1.msra.mxu0 0.0
        %1055 = vmatprep.subr.mxu0 0.0
        %1056 = vmatpush1.msra.mxu0 0.0
        %1057 = vmatprep.subr.mxu0 0.0
        %1058 = vmatpush1.msra.mxu0 0.0
        %1059 = vmatprep.subr.mxu0 %v1028
        %1060 = vmatpush1.msra.mxu0 %v1027
        %1061 = vmatprep.subr.mxu0 0.0
        %1062 = vmatpush2.msra.mxu0 0.0
        %1063 = vmatprep.subr.mxu0 0.0
        %1064 = vmatpush2.msra.mxu0 0.0
        %1065 = vmatprep.subr.mxu0 0.0
        %1066 = vmatpush2.msra.mxu0 0.0
        %1067 = vmatprep.subr.mxu0 0.0
        %1068 = vmatpush2.msra.mxu0 0.0
        %1069 = vmatprep.subr.mxu0 0.0
        %1070 = vmatpush2.msra.mxu0 0.0
        %1071 = vmatprep.subr.mxu0 0.0
        %1072 = vmatpush2.msra.mxu0 0.0
        %1073 = vmatprep.subr.mxu0 0.0
        %1074 = vmatpush2.msra.mxu0 0.0
        %1075 = vmatprep.subr.mxu0 0.0
        %1076 = vmatpush2.msra.mxu0 0.0
        %1077 = vmatprep.subr.mxu0 0.0
        %1078 = vmatpush2.msra.mxu0 0.0
        %1079 = vmatprep.subr.mxu0 0.0
        %1080 = vmatpush2.msra.mxu0 0.0
        %1081 = vmatprep.subr.mxu0 0.0
        %1082 = vmatpush2.msra.mxu0 0.0
        %1083 = vmatprep.subr.mxu0 0.0
        %1084 = vmatpush2.msra.mxu0 0.0
        %1085 = vmatprep.subr.mxu0 0.0
        %1086 = vmatpush2.msra.mxu0 0.0
        %1087 = vmatprep.subr.mxu0 0.0
        %1088 = vmatpush2.msra.mxu0 0.0
        %1089 = vmatprep.subr.mxu0 0.0
        %1090 = vmatpush2.msra.mxu0 0.0
        %1091 = vmatprep.subr.mxu0 0.0
        %1092 = vmatpush2.msra.mxu0 0.0
        %1093 = vmatprep.mubr.f32.mxu0 0.0
        %1094 = vmatmul.mubr.f32.gmra.mxu0 %v935
        %v1095 = vpop.f32.mrf.mxu0
        %v1096 = vadd.f32 %v927, %v1095
        %v1097 = vpop.f32.mrf.mxu0
        %v1098 = vadd.f32 %v927, %v1097
        %1099 = vmatprep.mubr.f32.mxu0 0.0
        %1100 = vmatmul.mubr.f32.gmra.mxu0 %v938
        %v1101 = vpop.f32.mrf.mxu0
        %v1102 = vadd.f32 %v932, %v1101
        %v1103 = vpop.f32.mrf.mxu0
        %v1104 = vadd.f32 %v932, %v1103
        %1105 = vdwg.mxu0
        %v1106 = vmax.f32 %v1096, 0.0
        %v1107 = vmax.f32 %v1098, 0.0
        %v1108 = vmax.f32 %v1102, 0.0
        %v1109 = vmax.f32 %v1104, 0.0
        %1110 = vst [vmem:[%s419 + $0x20] sm:$0xff] %v1106
        %1111 = vst [vmem:[%s419 + $0x28] sm:$0xff] %v1107
        %1112 = vst [vmem:[%s419 + $0x30] sm:$0xff] %v1108
        %1113 = vst [vmem:[%s419 + $0x38] sm:$0xff] %v1109
        %v1114 = vadd.f32 %v902, %v918
        %v1115 = vadd.f32 %v903, %v918
        %v1116 = vmax.f32 %v1114, 0.0
        %v1117 = vmax.f32 %v1115, 0.0
        %1118 = vmatprep.subr.mxu0 0.0
        %1119 = vmatpush1.msra.mxu0 0.0
        %1120 = vmatprep.subr.mxu0 0.0
        %1121 = vmatpush1.msra.mxu0 0.0
        %1122 = vmatprep.subr.mxu0 0.0
        %1123 = vmatpush1.msra.mxu0 0.0
        %1124 = vmatprep.subr.mxu0 0.0
        %1125 = vmatpush1.msra.mxu0 0.0
        %1126 = vmatprep.subr.mxu0 0.0
        %1127 = vmatpush1.msra.mxu0 0.0
        %1128 = vmatprep.subr.mxu0 0.0
        %1129 = vmatpush1.msra.mxu0 0.0
        %1130 = vmatprep.subr.mxu0 0.0
        %1131 = vmatpush1.msra.mxu0 0.0
        %1132 = vmatprep.subr.mxu0 0.0
        %1133 = vmatpush1.msra.mxu0 0.0
        %1134 = vmatprep.subr.mxu0 0.0
        %1135 = vmatpush1.msra.mxu0 0.0
        %1136 = vmatprep.subr.mxu0 0.0
        %1137 = vmatpush1.msra.mxu0 0.0
        %1138 = vmatprep.subr.mxu0 0.0
        %1139 = vmatpush1.msra.mxu0 0.0
        %1140 = vmatprep.subr.mxu0 0.0
        %1141 = vmatpush1.msra.mxu0 0.0
        %1142 = vmatprep.subr.mxu0 0.0
        %1143 = vmatpush1.msra.mxu0 0.0
        %1144 = vmatprep.subr.mxu0 0.0
        %1145 = vmatpush1.msra.mxu0 0.0
        %1146 = vmatprep.subr.mxu0 0.0
        %1147 = vmatpush1.msra.mxu0 0.0
        %1148 = vmatprep.subr.mxu0 %v1117
        %1149 = vmatpush1.msra.mxu0 %v1116
        %1150 = vmatprep.subr.mxu0 0.0
        %1151 = vmatpush2.msra.mxu0 0.0
        %1152 = vmatprep.subr.mxu0 0.0
        %1153 = vmatpush2.msra.mxu0 0.0
        %1154 = vmatprep.subr.mxu0 0.0
        %1155 = vmatpush2.msra.mxu0 0.0
        %1156 = vmatprep.subr.mxu0 0.0
        %1157 = vmatpush2.msra.mxu0 0.0
        %1158 = vmatprep.subr.mxu0 0.0
        %1159 = vmatpush2.msra.mxu0 0.0
        %1160 = vmatprep.subr.mxu0 0.0
        %1161 = vmatpush2.msra.mxu0 0.0
        %1162 = vmatprep.subr.mxu0 0.0
        %1163 = vmatpush2.msra.mxu0 0.0
        %1164 = vmatprep.subr.mxu0 0.0
        %1165 = vmatpush2.msra.mxu0 0.0
        %1166 = vmatprep.subr.mxu0 0.0
        %1167 = vmatpush2.msra.mxu0 0.0
        %1168 = vmatprep.subr.mxu0 0.0
        %1169 = vmatpush2.msra.mxu0 0.0
        %1170 = vmatprep.subr.mxu0 0.0
        %1171 = vmatpush2.msra.mxu0 0.0
        %1172 = vmatprep.subr.mxu0 0.0
        %1173 = vmatpush2.msra.mxu0 0.0
        %1174 = vmatprep.subr.mxu0 0.0
        %1175 = vmatpush2.msra.mxu0 0.0
        %1176 = vmatprep.subr.mxu0 0.0
        %1177 = vmatpush2.msra.mxu0 0.0
        %1178 = vmatprep.subr.mxu0 0.0
        %1179 = vmatpush2.msra.mxu0 0.0
        %1180 = vmatprep.subr.mxu0 0.0
        %1181 = vmatpush2.msra.mxu0 0.0
        %1182 = vmatprep.mubr.f32.mxu0 0.0
        %1183 = vmatmul.mubr.f32.gmra.mxu0 %v935
        %v1184 = vpop.f32.mrf.mxu0
        %v1185 = vadd.f32 %v927, %v1184
        %v1186 = vpop.f32.mrf.mxu0
        %v1187 = vadd.f32 %v927, %v1186
        %1188 = vmatprep.mubr.f32.mxu0 0.0
        %1189 = vmatmul.mubr.f32.gmra.mxu0 %v938
        %v1190 = vpop.f32.mrf.mxu0
        %v1191 = vadd.f32 %v932, %v1190
        %v1192 = vpop.f32.mrf.mxu0
        %v1193 = vadd.f32 %v932, %v1192
        %1194 = vdwg.mxu0
        %v1195 = vmax.f32 %v1185, 0.0
        %v1196 = vmax.f32 %v1187, 0.0
        %v1197 = vmax.f32 %v1191, 0.0
        %v1198 = vmax.f32 %v1193, 0.0
        %1199 = vst [vmem:[%s419 + $0x40] sm:$0xff] %v1195
        %1200 = vst [vmem:[%s419 + $0x48] sm:$0xff] %v1196
        %1201 = vst [vmem:[%s419 + $0x50] sm:$0xff] %v1197
        %1202 = vst [vmem:[%s419 + $0x58] sm:$0xff] %v1198
        %v1203 = vadd.f32 %v908, %v918
        %v1204 = vadd.f32 %v909, %v918
        %v1205 = vmax.f32 %v1203, 0.0
        %v1206 = vmax.f32 %v1204, 0.0
        %1207 = vmatprep.subr.mxu0 0.0
        %1208 = vmatpush1.msra.mxu0 0.0
        %1209 = vmatprep.subr.mxu0 0.0
        %1210 = vmatpush1.msra.mxu0 0.0
        %1211 = vmatprep.subr.mxu0 0.0
        %1212 = vmatpush1.msra.mxu0 0.0
        %1213 = vmatprep.subr.mxu0 0.0
        %1214 = vmatpush1.msra.mxu0 0.0
        %1215 = vmatprep.subr.mxu0 0.0
        %1216 = vmatpush1.msra.mxu0 0.0
        %1217 = vmatprep.subr.mxu0 0.0
        %1218 = vmatpush1.msra.mxu0 0.0
        %1219 = vmatprep.subr.mxu0 0.0
        %1220 = vmatpush1.msra.mxu0 0.0
        %1221 = vmatprep.subr.mxu0 0.0
        %1222 = vmatpush1.msra.mxu0 0.0
        %1223 = vmatprep.subr.mxu0 0.0
        %1224 = vmatpush1.msra.mxu0 0.0
        %1225 = vmatprep.subr.mxu0 0.0
        %1226 = vmatpush1.msra.mxu0 0.0
        %1227 = vmatprep.subr.mxu0 0.0
        %1228 = vmatpush1.msra.mxu0 0.0
        %1229 = vmatprep.subr.mxu0 0.0
        %1230 = vmatpush1.msra.mxu0 0.0
        %1231 = vmatprep.subr.mxu0 0.0
        %1232 = vmatpush1.msra.mxu0 0.0
        %1233 = vmatprep.subr.mxu0 0.0
        %1234 = vmatpush1.msra.mxu0 0.0
        %1235 = vmatprep.subr.mxu0 0.0
        %1236 = vmatpush1.msra.mxu0 0.0
        %1237 = vmatprep.subr.mxu0 %v1206
        %1238 = vmatpush1.msra.mxu0 %v1205
        %1239 = vmatprep.subr.mxu0 0.0
        %1240 = vmatpush2.msra.mxu0 0.0
        %1241 = vmatprep.subr.mxu0 0.0
        %1242 = vmatpush2.msra.mxu0 0.0
        %1243 = vmatprep.subr.mxu0 0.0
        %1244 = vmatpush2.msra.mxu0 0.0
        %1245 = vmatprep.subr.mxu0 0.0
        %1246 = vmatpush2.msra.mxu0 0.0
        %1247 = vmatprep.subr.mxu0 0.0
        %1248 = vmatpush2.msra.mxu0 0.0
        %1249 = vmatprep.subr.mxu0 0.0
        %1250 = vmatpush2.msra.mxu0 0.0
        %1251 = vmatprep.subr.mxu0 0.0
        %1252 = vmatpush2.msra.mxu0 0.0
        %1253 = vmatprep.subr.mxu0 0.0
        %1254 = vmatpush2.msra.mxu0 0.0
        %1255 = vmatprep.subr.mxu0 0.0
        %1256 = vmatpush2.msra.mxu0 0.0
        %1257 = vmatprep.subr.mxu0 0.0
        %1258 = vmatpush2.msra.mxu0 0.0
        %1259 = vmatprep.subr.mxu0 0.0
        %1260 = vmatpush2.msra.mxu0 0.0
        %1261 = vmatprep.subr.mxu0 0.0
        %1262 = vmatpush2.msra.mxu0 0.0
        %1263 = vmatprep.subr.mxu0 0.0
        %1264 = vmatpush2.msra.mxu0 0.0
        %1265 = vmatprep.subr.mxu0 0.0
        %1266 = vmatpush2.msra.mxu0 0.0
        %1267 = vmatprep.subr.mxu0 0.0
        %1268 = vmatpush2.msra.mxu0 0.0
        %1269 = vmatprep.subr.mxu0 0.0
        %1270 = vmatpush2.msra.mxu0 0.0
        %1271 = vmatprep.mubr.f32.mxu0 0.0
        %1272 = vmatmul.mubr.f32.gmra.mxu0 %v935
        %v1273 = vpop.f32.mrf.mxu0
        %v1274 = vadd.f32 %v927, %v1273
        %v1275 = vpop.f32.mrf.mxu0
        %v1276 = vadd.f32 %v927, %v1275
        %1277 = vmatprep.mubr.f32.mxu0 0.0
        %1278 = vmatmul.mubr.f32.gmra.mxu0 %v938
        %v1279 = vpop.f32.mrf.mxu0
        %v1280 = vadd.f32 %v932, %v1279
        %v1281 = vpop.f32.mrf.mxu0
        %v1282 = vadd.f32 %v932, %v1281
        %1283 = vdwg.mxu0
        %v1284 = vmax.f32 %v1274, 0.0
        %v1285 = vmax.f32 %v1276, 0.0
        %v1286 = vmax.f32 %v1280, 0.0
        %v1287 = vmax.f32 %v1282, 0.0
        %1288 = vst [vmem:[%s419 + $0x60] sm:$0xff] %v1284
        %1289 = vst [vmem:[%s419 + $0x68] sm:$0xff] %v1285
        %1290 = vst [vmem:[%s419 + $0x70] sm:$0xff] %v1286
        %1291 = vst [vmem:[%s419 + $0x78] sm:$0xff] %v1287
        %s1292 = sand.u32 %s271, 1
        %s1293 = scalar_lea.sflag [#allocation4], %s1292
        %s1294 = sand.u32 %s271, 1
        %s1295 = smul.addr %s1294, 128
        %s1296 = scalar_lea.vmem [#allocation8], %s1295
        // Predicated region
        $region77: #{tpu_custom_call.1} parent=63 // pred_check
          %p1297 = pneg %p281
        $region78: #{tpu_custom_call.1} parent=63 // pred_check_branch
          %1299 = sbr.rel (%p1297) target = $region80
        $region79: #{tpu_custom_call.1} parent=63 // pred_region
          %s1301 = ssub.s32 2048, 2048
          %1302 = vsyncadd %s1293, %s1301
          %s1303 = smul.addr %s27, 16
          %s1304 = smul.addr %s1303, 128
          %s1305 = scalar_lea.hbm %s11, %s1304
          %s1306 = sshll.u32 %s1296, 4
          %s1307 = int_to_ptr.vmem [resolvable:$true] %s1306
          %1312 = dma.vmem_to_hbm [thread:$0]  %s1307, 2048, %s1305, %s1293, 256, 256, 16
        $region80: #{tpu_custom_call.1} parent=63 // pred_fallthru
          _
      $region64: #{tpu_custom_call.1} parent=5 // pred_fallthru
        _
      %p1313 = scmp.le.s32.totalorder 2, %s22
      // Predicated region
      $region81: #{tpu_custom_call.1} parent=5 // pred_check
        %p1314 = pneg %p1313
      $region82: #{tpu_custom_call.1} parent=5 // pred_check_branch
        %1316 = sbr.rel (%p1314) target = $region84
      $region83: #{tpu_custom_call.1} parent=5 // pred_region
        %s1317 = ssub.s32 %s22, 2
        // Predicated region
        $region85: #{tpu_custom_call.1} parent=83 // pred_check
          %p1318 = pneg %p287
        $region86: #{tpu_custom_call.1} parent=83 // pred_check_branch
          %1320 = sbr.rel (%p1318) target = $region88
        $region87: #{tpu_custom_call.1} parent=83 // pred_region
          %s1321 = sand.u32 %s272, 1
          %s1322 = scalar_lea.sflag [#allocation4], %s1321
          %s1323 = sand.u32 %s272, 1
          %s1324 = smul.addr %s1323, 128
          %s1325 = scalar_lea.vmem [#allocation8], %s1324
          %1326 = dma.done %s1322, 2048
        $region88: #{tpu_custom_call.1} parent=83 // pred_fallthru
          _
      $region84: #{tpu_custom_call.1} parent=5 // pred_fallthru
        _
    $region6: #{tpu_custom_call.1} parent=1 // loop_footer
      %s26 = sadd.s32 1, %s22
    $region7: #{tpu_custom_call.1} parent=1 // loop_footer_branch
      %21 = sbr.rel target = $region3
    $region8: #{tpu_custom_call.1} parent=1 // loop_exit
      _
    %1327 = vsyncpa [#allocation3], 1
    %s1328 = scalar_lea.sflag [#allocation3], 1
    %1329 = vsyncpa %s1328, 1
    %1330 = vsyncpa [#allocation6], 1
    %1331 = vsyncpa [#allocation4], 1
    %s1332 = scalar_lea.sflag [#allocation4], 1
    %1333 = vsyncpa %s1332, 1

</llo_original>
